<compile_context>
chip_gen: v5e
topology: v5e:2x2
jax: 0.10.0
libtpu: 0.0.40
codegen_flags: <defaults>
</compile_context>

<pallas_src>
import jax
import jax.numpy as jnp
from jax.experimental import pallas as pl
from jax.experimental.pallas import tpu as pltpu

MATMUL_DTYPE = jnp.float32   # jnp.bfloat16 -> full-rate MXU path on v6e/v7x


# ---------------------------------------------------------------------------
# One-time parameter preprocessing (hoisted out of the per-call path).
# ---------------------------------------------------------------------------
def prepare_params(params):
    """Builds the banded conv matrices / permuted fc1 weights.  Run ONCE."""
    f32 = jnp.float32
    w1, b1 = params["w1"].astype(f32), params["b1"].astype(f32)
    w2, b2 = params["w2"].astype(f32), params["b2"].astype(f32)
    wf1, bf1 = params["wf1"].astype(f32), params["bf1"].astype(f32)
    wf2, bf2 = params["wf2"].astype(f32), params["bf2"].astype(f32)

    dj = jnp.arange(5)[None, None, None, :]

    # conv1 column matmul:  W1[cin, di*256 + pj*128 + jj*10 + oc]
    #   = w1[oc, 0, di, cin - (2*jj + pj)]   (0 where the tap is out of band).
    cin = jnp.arange(28)[:, None, None, None]
    jj = jnp.arange(12)[None, :, None, None]
    pj = jnp.arange(2)[None, None, :, None]
    sel1 = (cin == 2 * jj + pj + dj).astype(f32)              # [28,12,2,5]
    w1_r = jnp.transpose(w1[:, 0], (1, 2, 0))                 # [di,dj,oc]
    core1 = jnp.einsum("cjpd,xdo->cxpjo", sel1, w1_r)         # [28,5,2,12,10]
    core1 = core1.reshape(28, 5, 2, 120)
    w1_mat = jnp.concatenate(
        [core1, jnp.zeros((28, 5, 2, 8), f32)], axis=-1).reshape(28, 1280)
    b1_row = jnp.concatenate([jnp.tile(b1, 12), jnp.zeros((8,), f32)])[None]

    # conv2 column matmul:  rows = stage-1 lane layout (j1*10 + ic),
    #   cols = di*256 + pj2*128 + jj2*20 + oc2.
    j1 = jnp.arange(12)[:, None, None, None]
    jj2 = jnp.arange(4)[None, :, None, None]
    pj2 = jnp.arange(2)[None, None, :, None]
    sel2 = (j1 == 2 * jj2 + pj2 + dj).astype(f32)             # [12,4,2,5]
    w2_r = jnp.transpose(w2, (2, 3, 1, 0))                    # [di,dj,ic,oc]
    core2 = jnp.einsum("jqpd,xdio->jixpqo", sel2, w2_r)       # [12,10,5,2,4,20]
    core2 = core2.reshape(120, 5, 2, 80)
    core2 = jnp.concatenate(
        [core2, jnp.zeros((120, 5, 2, 48), f32)], axis=-1).reshape(120, 1280)
    w2_mat = jnp.concatenate([core2, jnp.zeros((8, 1280), f32)], axis=0)
    b2_row = jnp.concatenate([jnp.tile(b2, 4), jnp.zeros((48,), f32)])[None]

    # fc1: permute rows from torch's (c,h,w) flatten order to our (h, w*20+c)
    # lane order and split per spatial row h (so the kernel never flattens).
    wf1_hwc = wf1.reshape(20, 4, 4, 50).transpose(1, 2, 0, 3).reshape(4, 80, 50)
    wf1_mat = jnp.concatenate([wf1_hwc, jnp.zeros((4, 48, 50), f32)], axis=1)

    md = MATMUL_DTYPE
    return {
        "w1": w1_mat.astype(md), "b1": b1_row,
        "w2": w2_mat.astype(md), "b2": b2_row,
        "wf1": wf1_mat.astype(md), "bf1": bf1[None],
        "wf2": wf2.astype(md), "bf2": bf2[None],
    }


# ---------------------------------------------------------------------------
# Fused whole-network kernel (one batch tile per grid step).
# ---------------------------------------------------------------------------
def _net_fwd_kernel(xph_ref, w1_ref, b1_ref, w2_ref, b2_ref,
                    wf1_ref, bf1_ref, wf2_ref, bf2_ref, o_ref):
    f32 = jnp.float32
    tb = xph_ref.shape[0]
    md = w1_ref.dtype

    # ---- Stage 1: conv1 (one MXU matmul) + 2x2 max-pool + ReLU ------------
    # xph rows are the input rows phase-decomposed mod 4 (row = 4*u + a4),
    # zero-padded to 64 rows/image, so every row slice below is contiguous.
    x = xph_ref[...].reshape(tb * 64, 28).astype(md)
    m1 = jnp.dot(x, w1_ref[...], preferred_element_type=f32)
    m1 = m1.reshape(tb, 4, 16, 1280)
    # m1[b, a4, u, di*256 + pj*128 + jj*10 + oc]
    #   = sum_dj x[b, 4u+a4, 2jj+pj+dj] * w1[oc, 0, di, dj]

    def conv1_pool_rows(a, pi):
        # conv1 output row 2*(2u+a)+pi for u in [0,8): sum the 5 row taps.
        acc = None
        for di in range(5):
            q = 2 * a + pi + di
            t = m1[:, q % 4, (q // 4):(q // 4) + 8, di * 256:(di + 1) * 256]
            acc = t if acc is None else acc + t
        return acc                                           # [tb, 8, 256]

    a1_par = []
    for a in range(2):                                       # output-row parity
        r0 = conv1_pool_rows(a, 0)
        r1 = conv1_pool_rows(a, 1)
        pooled = jnp.maximum(jnp.maximum(r0[..., :128], r0[..., 128:]),
                             jnp.maximum(r1[..., :128], r1[..., 128:]))
        a1_par.append(jnp.maximum(pooled + b1_ref[...], 0.0))
    a1 = jnp.concatenate(a1_par, axis=1)                     # [tb, 16, 128]
    # a1[b, a*8+u, jj*10+oc] = relu(maxpool(conv1))[b, oc, 2u+a, jj]
    # (rows u in {6,7} of each parity are padding and never read below).

    # ---- Stage 2: conv2 (one MXU matmul) + 2x2 max-pool + ReLU ------------
    # TODO(synk): nn.Dropout2d on the conv2 output is identity in eval mode.
    m2 = jnp.dot(a1.reshape(tb * 16, 128).astype(md), w2_ref[...],
                 preferred_element_type=f32)
    m2 = m2.reshape(tb, 2, 8, 1280)

    def conv2_pool_rows(pi):
        acc = None
        for di in range(5):
            q = pi + di
            t = m2[:, q % 2, (q // 2):(q // 2) + 4, di * 256:(di + 1) * 256]
            acc = t if acc is None else acc + t
        return acc                                           # [tb, 4, 256]

    r0 = conv2_pool_rows(0)
    r1 = conv2_pool_rows(1)
    pooled2 = jnp.maximum(jnp.maximum(r0[..., :128], r0[..., 128:]),
                          jnp.maximum(r1[..., :128], r1[..., 128:]))
    a2 = jnp.maximum(pooled2 + b2_ref[...], 0.0)             # [tb, 4, 128]
    # a2[b, h, w*20 + c] = relu(maxpool(conv2))[b, c, h, w]

    # ---- Stage 3: fc1 + ReLU (+ dropout = identity) + fc2 + log_softmax ---
    fc1 = None
    for h in range(4):                                       # contract over h
        part = jnp.dot(a2[:, h, :].astype(md), wf1_ref[h],
                       preferred_element_type=f32)
        fc1 = part if fc1 is None else fc1 + part
    h1 = jnp.maximum(fc1 + bf1_ref[...], 0.0)                # [tb, 50]
    # TODO(synk): F.dropout is identity in eval mode; training-mode dropout
    # would use pltpu.prng_seed / pltpu.prng_random_bits here.
    logits = jnp.dot(h1.astype(md), wf2_ref[...],
                     preferred_element_type=f32) + bf2_ref[...]
    z = logits - jnp.max(logits, axis=-1, keepdims=True)
    lse = jnp.log(jnp.sum(jnp.exp(z), axis=-1, keepdims=True))
    o_ref[:, 0, :] = (z - lse).astype(o_ref.dtype)


# ---------------------------------------------------------------------------
# Wrapper
# ---------------------------------------------------------------------------
def net_forward(prepped, x, *, tile_b=4):
    """Forward pass of `Net` (eval mode).  x: [B, 1, 28, 28] float32."""
    B = x.shape[0]
    assert x.shape[1:] == (1, 28, 28)
    # >= 2 grid steps whenever B >= 2 (shards across v7x's 2 TensorCores);
    # tile_b also bounds live-value VMEM (~0.4 MB/image) for v7x's 64 MiB.
    tb = max(1, min(tile_b, -(-B // 2)))
    b_pad = -(-B // tb) * tb

    # Only per-call glue: phase-decompose input rows mod 4 (row = 4*u + a4)
    # and zero-pad to 64 rows.  Touches only the raw ~3 KB/image input.
    x2 = x.reshape(B, 28, 28).astype(jnp.float32)
    if b_pad != B:
        x2 = jnp.concatenate(
            [x2, jnp.zeros((b_pad - B, 28, 28), x2.dtype)], axis=0)
    xph = jnp.pad(x2, ((0, 0), (0, 36), (0, 0)))
    xph = xph.reshape(b_pad, 16, 4, 28).transpose(0, 2, 1, 3)   # [B,4,16,28]

    grid = (b_pad // tb,)
    w_bytes = sum(int(v.size) * v.dtype.itemsize for v in prepped.values())
    cost = pl.CostEstimate(
        flops=int(b_pad) * 2 * (64 * 28 * 1280 + 16 * 128 * 1280
                                + 4 * 128 * 50 + 50 * 10),
        transcendentals=int(b_pad) * 11,
        bytes_accessed=int(xph.size) * 4 + int(b_pad) * 40
        + int(grid[0]) * w_bytes,
    )

    def full(shape):
        return pl.BlockSpec(shape, lambda i: (0,) * len(shape))

    out3 = pl.pallas_call(
        _net_fwd_kernel,
        out_shape=jax.ShapeDtypeStruct((b_pad, 1, 10), jnp.float32),
        grid=grid,
        in_specs=[
            pl.BlockSpec((tb, 4, 16, 28), lambda i: (i, 0, 0, 0)),
            full((28, 1280)),
            full((1, 128)),
            full((128, 1280)),
            full((1, 128)),
            full((4, 128, 50)),
            full((1, 50)),
            full((50, 10)),
            full((1, 10)),
        ],
        out_specs=pl.BlockSpec((tb, 1, 10), lambda i: (i, 0, 0)),
        compiler_params=pltpu.CompilerParams(
            dimension_semantics=("parallel",)),
        cost_estimate=cost,
    )(xph, prepped["w1"], prepped["b1"], prepped["w2"], prepped["b2"],
      prepped["wf1"], prepped["bf1"], prepped["wf2"], prepped["bf2"])
    return out3.reshape(b_pad, 10)[:B]


# ---------------------------------------------------------------------------
# Pure-JAX (XLA) reference matching the PyTorch module (eval mode).
# ---------------------------------------------------------------------------
def net_forward_reference(params, x):
    def conv_pool_relu(y, w, b):
        y = jax.lax.conv_general_dilated(
            y, w, window_strides=(1, 1), padding="VALID",
            dimension_numbers=("NCHW", "OIHW", "NCHW"))
        y = y + b[None, :, None, None]
        Bb, C, H, W = y.shape
        y = jnp.max(y.reshape(Bb, C, H // 2, 2, W // 2, 2), axis=(3, 5))
        return jnp.maximum(y, 0.0)

    y = conv_pool_relu(x, params["w1"], params["b1"])
    y = conv_pool_relu(y, params["w2"], params["b2"])
    y = y.reshape(y.shape[0], -1)                            # torch .view order
    y = jnp.maximum(y @ params["wf1"] + params["bf1"], 0.0)
    y = y @ params["wf2"] + params["bf2"]
    return jax.nn.log_softmax(y, axis=-1)


def init_params(key):
    """Deterministic PyTorch-default-style init (uniform(+-1/sqrt(fan_in)))."""
    def uniform(k, shape, fan_in):
        bound = 1.0 / (fan_in ** 0.5)
        return jax.random.uniform(k, shape, jnp.float32, -bound, bound)

    ks = jax.random.split(key, 8)
    return {
        "w1": uniform(ks[0], (10, 1, 5, 5), 1 * 25),    # Conv2d(1, 10, 5)
        "b1": uniform(ks[1], (10,), 1 * 25),
        "w2": uniform(ks[2], (20, 10, 5, 5), 10 * 25),  # Conv2d(10, 20, 5)
        "b2": uniform(ks[3], (20,), 10 * 25),
        "wf1": uniform(ks[4], (320, 50), 320),          # Linear(320, 50) [in,out]
        "bf1": uniform(ks[5], (50,), 320),
        "wf2": uniform(ks[6], (50, 10), 50),            # Linear(50, 10)  [in,out]
        "bf2": uniform(ks[7], (10,), 50),
    }


if __name__ == "__main__":
    key = jax.random.PRNGKey(0)
    pkey, xkey = jax.random.split(key)
    params = init_params(pkey)
    prepped = prepare_params(params)        # one-time weight preprocessing

    # MNIST-style input implied by fc1's 320 = 20*4*4 features: [B, 1, 28, 28].
    x = jax.random.normal(xkey, (2, 1, 28, 28), jnp.float32)

    fwd = jax.jit(net_forward)
    out = jax.block_until_ready(fwd(prepped, x))

    assert out.shape == (2, 10), out.shape
    assert out.dtype == jnp.float32
    # log_softmax rows should exponentiate-sum to ~1.
    assert jnp.allclose(jnp.sum(jnp.exp(out), axis=-1), 1.0, atol=1e-4)
    # Validate against a pure-JAX reference of the PyTorch module.
    ref = net_forward_reference(params, x)
    tol = 2e-3 if MATMUL_DTYPE == jnp.float32 else 3e-2
    assert jnp.allclose(out, ref, atol=tol, rtol=tol), float(
        jnp.max(jnp.abs(out - ref)))
    print("KERNEL_OK")
</pallas_src>

<mosaic_0001>
module attributes {stable_mosaic.version = 11 : i64} {
  func.func @_net_fwd_kernel(%arg0: i32, %arg1: memref<1x4x16x28xf32, #tpu.memory_space<vmem>>, %arg2: memref<28x1280xf32, #tpu.memory_space<vmem>>, %arg3: memref<1x128xf32, #tpu.memory_space<vmem>>, %arg4: memref<128x1280xf32, #tpu.memory_space<vmem>>, %arg5: memref<1x128xf32, #tpu.memory_space<vmem>>, %arg6: memref<4x128x50xf32, #tpu.memory_space<vmem>>, %arg7: memref<1x50xf32, #tpu.memory_space<vmem>>, %arg8: memref<50x10xf32, #tpu.memory_space<vmem>>, %arg9: memref<1x10xf32, #tpu.memory_space<vmem>>, %arg10: memref<1x1x10xf32, #tpu.memory_space<vmem>>) attributes {dimension_semantics = [#tpu.dimension_semantics<parallel>], iteration_bounds = array<i64: 2>, scalar_prefetch = 0 : i64, scratch_operands = 0 : i64, tpu.core_type = #tpu.core_type<tc>, window_params = [{transform_indices = @transform_0, window_bounds = array<i64: 1, 4, 16, 28>}, {pipeline_mode = #tpu.pipeline_mode<synchronous>, transform_indices = @transform_1, window_bounds = array<i64: 28, 1280>}, {pipeline_mode = #tpu.pipeline_mode<synchronous>, transform_indices = @transform_2, window_bounds = array<i64: 1, 128>}, {pipeline_mode = #tpu.pipeline_mode<synchronous>, transform_indices = @transform_3, window_bounds = array<i64: 128, 1280>}, {pipeline_mode = #tpu.pipeline_mode<synchronous>, transform_indices = @transform_4, window_bounds = array<i64: 1, 128>}, {pipeline_mode = #tpu.pipeline_mode<synchronous>, transform_indices = @transform_5, window_bounds = array<i64: 4, 128, 50>}, {pipeline_mode = #tpu.pipeline_mode<synchronous>, transform_indices = @transform_6, window_bounds = array<i64: 1, 50>}, {pipeline_mode = #tpu.pipeline_mode<synchronous>, transform_indices = @transform_7, window_bounds = array<i64: 50, 10>}, {pipeline_mode = #tpu.pipeline_mode<synchronous>, transform_indices = @transform_8, window_bounds = array<i64: 1, 10>}, {transform_indices = @transform_9, window_bounds = array<i64: 1, 1, 10>}]} {
    %c0 = arith.constant 0 : index
    %c0_0 = arith.constant 0 : index
    %c0_1 = arith.constant 0 : index
    %c0_2 = arith.constant 0 : index
    %0 = vector.load %arg1[%c0, %c0_0, %c0_1, %c0_2] : memref<1x4x16x28xf32, #tpu.memory_space<vmem>>, vector<1x4x16x28xf32>
    %1 = vector.shape_cast %0 : vector<1x4x16x28xf32> to vector<64x28xf32>
    %c0_3 = arith.constant 0 : index
    %c0_4 = arith.constant 0 : index
    %2 = vector.load %arg2[%c0_3, %c0_4] : memref<28x1280xf32, #tpu.memory_space<vmem>>, vector<28x1280xf32>
    %cst = arith.constant dense<0.000000e+00> : vector<64x1280xf32>
    %3 = tpu.matmul %1, %2, %cst {dimension_numbers = #tpu.dot_dimension_numbers<[1], [0], [0], [1], [0, 0, 1, 1], [], []>} : vector<64x28xf32>, vector<28x1280xf32>, vector<64x1280xf32> -> vector<64x1280xf32>
    %4 = vector.shape_cast %3 : vector<64x1280xf32> to vector<1x4x16x1280xf32>
    %5 = vector.extract_strided_slice %4 {offsets = [0, 0, 0, 0], sizes = [1, 1, 8, 256], strides = [1, 1, 1, 1]} : vector<1x4x16x1280xf32> to vector<1x1x8x256xf32>
    %6 = vector.shape_cast %5 : vector<1x1x8x256xf32> to vector<1x8x256xf32>
    %7 = vector.extract_strided_slice %4 {offsets = [0, 1, 0, 256], sizes = [1, 1, 8, 256], strides = [1, 1, 1, 1]} : vector<1x4x16x1280xf32> to vector<1x1x8x256xf32>
    %8 = vector.shape_cast %7 : vector<1x1x8x256xf32> to vector<1x8x256xf32>
    %9 = arith.addf %6, %8 : vector<1x8x256xf32>
    %10 = vector.extract_strided_slice %4 {offsets = [0, 2, 0, 512], sizes = [1, 1, 8, 256], strides = [1, 1, 1, 1]} : vector<1x4x16x1280xf32> to vector<1x1x8x256xf32>
    %11 = vector.shape_cast %10 : vector<1x1x8x256xf32> to vector<1x8x256xf32>
    %12 = arith.addf %9, %11 : vector<1x8x256xf32>
    %13 = vector.extract_strided_slice %4 {offsets = [0, 3, 0, 768], sizes = [1, 1, 8, 256], strides = [1, 1, 1, 1]} : vector<1x4x16x1280xf32> to vector<1x1x8x256xf32>
    %14 = vector.shape_cast %13 : vector<1x1x8x256xf32> to vector<1x8x256xf32>
    %15 = arith.addf %12, %14 : vector<1x8x256xf32>
    %16 = vector.extract_strided_slice %4 {offsets = [0, 0, 1, 1024], sizes = [1, 1, 8, 256], strides = [1, 1, 1, 1]} : vector<1x4x16x1280xf32> to vector<1x1x8x256xf32>
    %17 = vector.shape_cast %16 : vector<1x1x8x256xf32> to vector<1x8x256xf32>
    %18 = arith.addf %15, %17 : vector<1x8x256xf32>
    %19 = vector.extract_strided_slice %4 {offsets = [0, 1, 0, 0], sizes = [1, 1, 8, 256], strides = [1, 1, 1, 1]} : vector<1x4x16x1280xf32> to vector<1x1x8x256xf32>
    %20 = vector.shape_cast %19 : vector<1x1x8x256xf32> to vector<1x8x256xf32>
    %21 = vector.extract_strided_slice %4 {offsets = [0, 2, 0, 256], sizes = [1, 1, 8, 256], strides = [1, 1, 1, 1]} : vector<1x4x16x1280xf32> to vector<1x1x8x256xf32>
    %22 = vector.shape_cast %21 : vector<1x1x8x256xf32> to vector<1x8x256xf32>
    %23 = arith.addf %20, %22 : vector<1x8x256xf32>
    %24 = vector.extract_strided_slice %4 {offsets = [0, 3, 0, 512], sizes = [1, 1, 8, 256], strides = [1, 1, 1, 1]} : vector<1x4x16x1280xf32> to vector<1x1x8x256xf32>
    %25 = vector.shape_cast %24 : vector<1x1x8x256xf32> to vector<1x8x256xf32>
    %26 = arith.addf %23, %25 : vector<1x8x256xf32>
    %27 = vector.extract_strided_slice %4 {offsets = [0, 0, 1, 768], sizes = [1, 1, 8, 256], strides = [1, 1, 1, 1]} : vector<1x4x16x1280xf32> to vector<1x1x8x256xf32>
    %28 = vector.shape_cast %27 : vector<1x1x8x256xf32> to vector<1x8x256xf32>
    %29 = arith.addf %26, %28 : vector<1x8x256xf32>
    %30 = vector.extract_strided_slice %4 {offsets = [0, 1, 1, 1024], sizes = [1, 1, 8, 256], strides = [1, 1, 1, 1]} : vector<1x4x16x1280xf32> to vector<1x1x8x256xf32>
    %31 = vector.shape_cast %30 : vector<1x1x8x256xf32> to vector<1x8x256xf32>
    %32 = arith.addf %29, %31 : vector<1x8x256xf32>
    %33 = vector.extract_strided_slice %18 {offsets = [0, 0, 0], sizes = [1, 8, 128], strides = [1, 1, 1]} : vector<1x8x256xf32> to vector<1x8x128xf32>
    %34 = vector.extract_strided_slice %18 {offsets = [0, 0, 128], sizes = [1, 8, 128], strides = [1, 1, 1]} : vector<1x8x256xf32> to vector<1x8x128xf32>
    %35 = arith.maximumf %33, %34 : vector<1x8x128xf32>
    %36 = vector.extract_strided_slice %32 {offsets = [0, 0, 0], sizes = [1, 8, 128], strides = [1, 1, 1]} : vector<1x8x256xf32> to vector<1x8x128xf32>
    %37 = vector.extract_strided_slice %32 {offsets = [0, 0, 128], sizes = [1, 8, 128], strides = [1, 1, 1]} : vector<1x8x256xf32> to vector<1x8x128xf32>
    %38 = arith.maximumf %36, %37 : vector<1x8x128xf32>
    %39 = arith.maximumf %35, %38 : vector<1x8x128xf32>
    %c0_5 = arith.constant 0 : index
    %c0_6 = arith.constant 0 : index
    %40 = vector.load %arg3[%c0_5, %c0_6] : memref<1x128xf32, #tpu.memory_space<vmem>>, vector<1x128xf32>
    %41 = vector.shape_cast %40 : vector<1x128xf32> to vector<1x1x128xf32>
    %42 = vector.broadcast %41 : vector<1x1x128xf32> to vector<1x8x128xf32>
    %43 = arith.addf %39, %42 : vector<1x8x128xf32>
    %cst_7 = arith.constant 0.000000e+00 : f32
    %44 = vector.broadcast %cst_7 : f32 to vector<1x8x128xf32>
    %45 = arith.maximumf %43, %44 : vector<1x8x128xf32>
    %46 = vector.extract_strided_slice %4 {offsets = [0, 2, 0, 0], sizes = [1, 1, 8, 256], strides = [1, 1, 1, 1]} : vector<1x4x16x1280xf32> to vector<1x1x8x256xf32>
    %47 = vector.shape_cast %46 : vector<1x1x8x256xf32> to vector<1x8x256xf32>
    %48 = vector.extract_strided_slice %4 {offsets = [0, 3, 0, 256], sizes = [1, 1, 8, 256], strides = [1, 1, 1, 1]} : vector<1x4x16x1280xf32> to vector<1x1x8x256xf32>
    %49 = vector.shape_cast %48 : vector<1x1x8x256xf32> to vector<1x8x256xf32>
    %50 = arith.addf %47, %49 : vector<1x8x256xf32>
    %51 = vector.extract_strided_slice %4 {offsets = [0, 0, 1, 512], sizes = [1, 1, 8, 256], strides = [1, 1, 1, 1]} : vector<1x4x16x1280xf32> to vector<1x1x8x256xf32>
    %52 = vector.shape_cast %51 : vector<1x1x8x256xf32> to vector<1x8x256xf32>
    %53 = arith.addf %50, %52 : vector<1x8x256xf32>
    %54 = vector.extract_strided_slice %4 {offsets = [0, 1, 1, 768], sizes = [1, 1, 8, 256], strides = [1, 1, 1, 1]} : vector<1x4x16x1280xf32> to vector<1x1x8x256xf32>
    %55 = vector.shape_cast %54 : vector<1x1x8x256xf32> to vector<1x8x256xf32>
    %56 = arith.addf %53, %55 : vector<1x8x256xf32>
    %57 = vector.extract_strided_slice %4 {offsets = [0, 2, 1, 1024], sizes = [1, 1, 8, 256], strides = [1, 1, 1, 1]} : vector<1x4x16x1280xf32> to vector<1x1x8x256xf32>
    %58 = vector.shape_cast %57 : vector<1x1x8x256xf32> to vector<1x8x256xf32>
    %59 = arith.addf %56, %58 : vector<1x8x256xf32>
    %60 = vector.extract_strided_slice %4 {offsets = [0, 3, 0, 0], sizes = [1, 1, 8, 256], strides = [1, 1, 1, 1]} : vector<1x4x16x1280xf32> to vector<1x1x8x256xf32>
    %61 = vector.shape_cast %60 : vector<1x1x8x256xf32> to vector<1x8x256xf32>
    %62 = vector.extract_strided_slice %4 {offsets = [0, 0, 1, 256], sizes = [1, 1, 8, 256], strides = [1, 1, 1, 1]} : vector<1x4x16x1280xf32> to vector<1x1x8x256xf32>
    %63 = vector.shape_cast %62 : vector<1x1x8x256xf32> to vector<1x8x256xf32>
    %64 = arith.addf %61, %63 : vector<1x8x256xf32>
    %65 = vector.extract_strided_slice %4 {offsets = [0, 1, 1, 512], sizes = [1, 1, 8, 256], strides = [1, 1, 1, 1]} : vector<1x4x16x1280xf32> to vector<1x1x8x256xf32>
    %66 = vector.shape_cast %65 : vector<1x1x8x256xf32> to vector<1x8x256xf32>
    %67 = arith.addf %64, %66 : vector<1x8x256xf32>
    %68 = vector.extract_strided_slice %4 {offsets = [0, 2, 1, 768], sizes = [1, 1, 8, 256], strides = [1, 1, 1, 1]} : vector<1x4x16x1280xf32> to vector<1x1x8x256xf32>
    %69 = vector.shape_cast %68 : vector<1x1x8x256xf32> to vector<1x8x256xf32>
    %70 = arith.addf %67, %69 : vector<1x8x256xf32>
    %71 = vector.extract_strided_slice %4 {offsets = [0, 3, 1, 1024], sizes = [1, 1, 8, 256], strides = [1, 1, 1, 1]} : vector<1x4x16x1280xf32> to vector<1x1x8x256xf32>
    %72 = vector.shape_cast %71 : vector<1x1x8x256xf32> to vector<1x8x256xf32>
    %73 = arith.addf %70, %72 : vector<1x8x256xf32>
    %74 = vector.extract_strided_slice %59 {offsets = [0, 0, 0], sizes = [1, 8, 128], strides = [1, 1, 1]} : vector<1x8x256xf32> to vector<1x8x128xf32>
    %75 = vector.extract_strided_slice %59 {offsets = [0, 0, 128], sizes = [1, 8, 128], strides = [1, 1, 1]} : vector<1x8x256xf32> to vector<1x8x128xf32>
    %76 = arith.maximumf %74, %75 : vector<1x8x128xf32>
    %77 = vector.extract_strided_slice %73 {offsets = [0, 0, 0], sizes = [1, 8, 128], strides = [1, 1, 1]} : vector<1x8x256xf32> to vector<1x8x128xf32>
    %78 = vector.extract_strided_slice %73 {offsets = [0, 0, 128], sizes = [1, 8, 128], strides = [1, 1, 1]} : vector<1x8x256xf32> to vector<1x8x128xf32>
    %79 = arith.maximumf %77, %78 : vector<1x8x128xf32>
    %80 = arith.maximumf %76, %79 : vector<1x8x128xf32>
    %c0_8 = arith.constant 0 : index
    %c0_9 = arith.constant 0 : index
    %81 = vector.load %arg3[%c0_8, %c0_9] : memref<1x128xf32, #tpu.memory_space<vmem>>, vector<1x128xf32>
    %82 = vector.shape_cast %81 : vector<1x128xf32> to vector<1x1x128xf32>
    %83 = vector.broadcast %82 : vector<1x1x128xf32> to vector<1x8x128xf32>
    %84 = arith.addf %80, %83 : vector<1x8x128xf32>
    %cst_10 = arith.constant 0.000000e+00 : f32
    %85 = vector.broadcast %cst_10 : f32 to vector<1x8x128xf32>
    %86 = arith.maximumf %84, %85 : vector<1x8x128xf32>
    %87 = tpu.concatenate %45, %86 in 1 : vector<1x8x128xf32>, vector<1x8x128xf32> -> vector<1x16x128xf32>
    %88 = vector.shape_cast %87 : vector<1x16x128xf32> to vector<16x128xf32>
    %c0_11 = arith.constant 0 : index
    %c0_12 = arith.constant 0 : index
    %89 = vector.load %arg4[%c0_11, %c0_12] : memref<128x1280xf32, #tpu.memory_space<vmem>>, vector<128x1280xf32>
    %cst_13 = arith.constant dense<0.000000e+00> : vector<16x1280xf32>
    %90 = tpu.matmul %88, %89, %cst_13 {dimension_numbers = #tpu.dot_dimension_numbers<[1], [0], [0], [1], [0, 0, 1, 1], [], []>} : vector<16x128xf32>, vector<128x1280xf32>, vector<16x1280xf32> -> vector<16x1280xf32>
    %91 = vector.shape_cast %90 : vector<16x1280xf32> to vector<1x2x8x1280xf32>
    %92 = vector.extract_strided_slice %91 {offsets = [0, 0, 0, 0], sizes = [1, 1, 4, 256], strides = [1, 1, 1, 1]} : vector<1x2x8x1280xf32> to vector<1x1x4x256xf32>
    %93 = vector.shape_cast %92 : vector<1x1x4x256xf32> to vector<1x4x256xf32>
    %94 = vector.extract_strided_slice %91 {offsets = [0, 1, 0, 256], sizes = [1, 1, 4, 256], strides = [1, 1, 1, 1]} : vector<1x2x8x1280xf32> to vector<1x1x4x256xf32>
    %95 = vector.shape_cast %94 : vector<1x1x4x256xf32> to vector<1x4x256xf32>
    %96 = arith.addf %93, %95 : vector<1x4x256xf32>
    %97 = vector.extract_strided_slice %91 {offsets = [0, 0, 1, 512], sizes = [1, 1, 4, 256], strides = [1, 1, 1, 1]} : vector<1x2x8x1280xf32> to vector<1x1x4x256xf32>
    %98 = vector.shape_cast %97 : vector<1x1x4x256xf32> to vector<1x4x256xf32>
    %99 = arith.addf %96, %98 : vector<1x4x256xf32>
    %100 = vector.extract_strided_slice %91 {offsets = [0, 1, 1, 768], sizes = [1, 1, 4, 256], strides = [1, 1, 1, 1]} : vector<1x2x8x1280xf32> to vector<1x1x4x256xf32>
    %101 = vector.shape_cast %100 : vector<1x1x4x256xf32> to vector<1x4x256xf32>
    %102 = arith.addf %99, %101 : vector<1x4x256xf32>
    %103 = vector.extract_strided_slice %91 {offsets = [0, 0, 2, 1024], sizes = [1, 1, 4, 256], strides = [1, 1, 1, 1]} : vector<1x2x8x1280xf32> to vector<1x1x4x256xf32>
    %104 = vector.shape_cast %103 : vector<1x1x4x256xf32> to vector<1x4x256xf32>
    %105 = arith.addf %102, %104 : vector<1x4x256xf32>
    %106 = vector.extract_strided_slice %91 {offsets = [0, 1, 0, 0], sizes = [1, 1, 4, 256], strides = [1, 1, 1, 1]} : vector<1x2x8x1280xf32> to vector<1x1x4x256xf32>
    %107 = vector.shape_cast %106 : vector<1x1x4x256xf32> to vector<1x4x256xf32>
    %108 = vector.extract_strided_slice %91 {offsets = [0, 0, 1, 256], sizes = [1, 1, 4, 256], strides = [1, 1, 1, 1]} : vector<1x2x8x1280xf32> to vector<1x1x4x256xf32>
    %109 = vector.shape_cast %108 : vector<1x1x4x256xf32> to vector<1x4x256xf32>
    %110 = arith.addf %107, %109 : vector<1x4x256xf32>
    %111 = vector.extract_strided_slice %91 {offsets = [0, 1, 1, 512], sizes = [1, 1, 4, 256], strides = [1, 1, 1, 1]} : vector<1x2x8x1280xf32> to vector<1x1x4x256xf32>
    %112 = vector.shape_cast %111 : vector<1x1x4x256xf32> to vector<1x4x256xf32>
    %113 = arith.addf %110, %112 : vector<1x4x256xf32>
    %114 = vector.extract_strided_slice %91 {offsets = [0, 0, 2, 768], sizes = [1, 1, 4, 256], strides = [1, 1, 1, 1]} : vector<1x2x8x1280xf32> to vector<1x1x4x256xf32>
    %115 = vector.shape_cast %114 : vector<1x1x4x256xf32> to vector<1x4x256xf32>
    %116 = arith.addf %113, %115 : vector<1x4x256xf32>
    %117 = vector.extract_strided_slice %91 {offsets = [0, 1, 2, 1024], sizes = [1, 1, 4, 256], strides = [1, 1, 1, 1]} : vector<1x2x8x1280xf32> to vector<1x1x4x256xf32>
    %118 = vector.shape_cast %117 : vector<1x1x4x256xf32> to vector<1x4x256xf32>
    %119 = arith.addf %116, %118 : vector<1x4x256xf32>
    %120 = vector.extract_strided_slice %105 {offsets = [0, 0, 0], sizes = [1, 4, 128], strides = [1, 1, 1]} : vector<1x4x256xf32> to vector<1x4x128xf32>
    %121 = vector.extract_strided_slice %105 {offsets = [0, 0, 128], sizes = [1, 4, 128], strides = [1, 1, 1]} : vector<1x4x256xf32> to vector<1x4x128xf32>
    %122 = arith.maximumf %120, %121 : vector<1x4x128xf32>
    %123 = vector.extract_strided_slice %119 {offsets = [0, 0, 0], sizes = [1, 4, 128], strides = [1, 1, 1]} : vector<1x4x256xf32> to vector<1x4x128xf32>
    %124 = vector.extract_strided_slice %119 {offsets = [0, 0, 128], sizes = [1, 4, 128], strides = [1, 1, 1]} : vector<1x4x256xf32> to vector<1x4x128xf32>
    %125 = arith.maximumf %123, %124 : vector<1x4x128xf32>
    %126 = arith.maximumf %122, %125 : vector<1x4x128xf32>
    %c0_14 = arith.constant 0 : index
    %c0_15 = arith.constant 0 : index
    %127 = vector.load %arg5[%c0_14, %c0_15] : memref<1x128xf32, #tpu.memory_space<vmem>>, vector<1x128xf32>
    %128 = vector.shape_cast %127 : vector<1x128xf32> to vector<1x1x128xf32>
    %129 = vector.broadcast %128 : vector<1x1x128xf32> to vector<1x4x128xf32>
    %130 = arith.addf %126, %129 : vector<1x4x128xf32>
    %cst_16 = arith.constant 0.000000e+00 : f32
    %131 = vector.broadcast %cst_16 : f32 to vector<1x4x128xf32>
    %132 = arith.maximumf %130, %131 : vector<1x4x128xf32>
    %133 = vector.extract_strided_slice %132 {offsets = [0, 0, 0], sizes = [1, 1, 128], strides = [1, 1, 1]} : vector<1x4x128xf32> to vector<1x1x128xf32>
    %134 = vector.shape_cast %133 : vector<1x1x128xf32> to vector<1x128xf32>
    %c0_17 = arith.constant 0 : index
    %c0_18 = arith.constant 0 : index
    %c0_19 = arith.constant 0 : index
    %135 = vector.load %arg6[%c0_17, %c0_18, %c0_19] : memref<4x128x50xf32, #tpu.memory_space<vmem>>, vector<1x128x50xf32>
    %136 = vector.shape_cast %135 : vector<1x128x50xf32> to vector<128x50xf32>
    %cst_20 = arith.constant dense<0.000000e+00> : vector<1x50xf32>
    %137 = tpu.matmul %134, %136, %cst_20 {dimension_numbers = #tpu.dot_dimension_numbers<[1], [0], [0], [1], [0, 0, 1, 1], [], []>} : vector<1x128xf32>, vector<128x50xf32>, vector<1x50xf32> -> vector<1x50xf32>
    %138 = vector.extract_strided_slice %132 {offsets = [0, 1, 0], sizes = [1, 1, 128], strides = [1, 1, 1]} : vector<1x4x128xf32> to vector<1x1x128xf32>
    %139 = vector.shape_cast %138 : vector<1x1x128xf32> to vector<1x128xf32>
    %c1 = arith.constant 1 : index
    %c0_21 = arith.constant 0 : index
    %c0_22 = arith.constant 0 : index
    %140 = vector.load %arg6[%c1, %c0_21, %c0_22] : memref<4x128x50xf32, #tpu.memory_space<vmem>>, vector<1x128x50xf32>
    %141 = vector.shape_cast %140 : vector<1x128x50xf32> to vector<128x50xf32>
    %cst_23 = arith.constant dense<0.000000e+00> : vector<1x50xf32>
    %142 = tpu.matmul %139, %141, %cst_23 {dimension_numbers = #tpu.dot_dimension_numbers<[1], [0], [0], [1], [0, 0, 1, 1], [], []>} : vector<1x128xf32>, vector<128x50xf32>, vector<1x50xf32> -> vector<1x50xf32>
    %143 = arith.addf %137, %142 : vector<1x50xf32>
    %144 = vector.extract_strided_slice %132 {offsets = [0, 2, 0], sizes = [1, 1, 128], strides = [1, 1, 1]} : vector<1x4x128xf32> to vector<1x1x128xf32>
    %145 = vector.shape_cast %144 : vector<1x1x128xf32> to vector<1x128xf32>
    %c2 = arith.constant 2 : index
    %c0_24 = arith.constant 0 : index
    %c0_25 = arith.constant 0 : index
    %146 = vector.load %arg6[%c2, %c0_24, %c0_25] : memref<4x128x50xf32, #tpu.memory_space<vmem>>, vector<1x128x50xf32>
    %147 = vector.shape_cast %146 : vector<1x128x50xf32> to vector<128x50xf32>
    %cst_26 = arith.constant dense<0.000000e+00> : vector<1x50xf32>
    %148 = tpu.matmul %145, %147, %cst_26 {dimension_numbers = #tpu.dot_dimension_numbers<[1], [0], [0], [1], [0, 0, 1, 1], [], []>} : vector<1x128xf32>, vector<128x50xf32>, vector<1x50xf32> -> vector<1x50xf32>
    %149 = arith.addf %143, %148 : vector<1x50xf32>
    %150 = vector.extract_strided_slice %132 {offsets = [0, 3, 0], sizes = [1, 1, 128], strides = [1, 1, 1]} : vector<1x4x128xf32> to vector<1x1x128xf32>
    %151 = vector.shape_cast %150 : vector<1x1x128xf32> to vector<1x128xf32>
    %c3 = arith.constant 3 : index
    %c0_27 = arith.constant 0 : index
    %c0_28 = arith.constant 0 : index
    %152 = vector.load %arg6[%c3, %c0_27, %c0_28] : memref<4x128x50xf32, #tpu.memory_space<vmem>>, vector<1x128x50xf32>
    %153 = vector.shape_cast %152 : vector<1x128x50xf32> to vector<128x50xf32>
    %cst_29 = arith.constant dense<0.000000e+00> : vector<1x50xf32>
    %154 = tpu.matmul %151, %153, %cst_29 {dimension_numbers = #tpu.dot_dimension_numbers<[1], [0], [0], [1], [0, 0, 1, 1], [], []>} : vector<1x128xf32>, vector<128x50xf32>, vector<1x50xf32> -> vector<1x50xf32>
    %155 = arith.addf %149, %154 : vector<1x50xf32>
    %c0_30 = arith.constant 0 : index
    %c0_31 = arith.constant 0 : index
    %156 = vector.load %arg7[%c0_30, %c0_31] : memref<1x50xf32, #tpu.memory_space<vmem>>, vector<1x50xf32>
    %157 = arith.addf %155, %156 : vector<1x50xf32>
    %cst_32 = arith.constant 0.000000e+00 : f32
    %158 = vector.broadcast %cst_32 : f32 to vector<1x50xf32>
    %159 = arith.maximumf %157, %158 : vector<1x50xf32>
    %c0_33 = arith.constant 0 : index
    %c0_34 = arith.constant 0 : index
    %160 = vector.load %arg8[%c0_33, %c0_34] : memref<50x10xf32, #tpu.memory_space<vmem>>, vector<50x10xf32>
    %cst_35 = arith.constant dense<0.000000e+00> : vector<1x10xf32>
    %161 = tpu.matmul %159, %160, %cst_35 {dimension_numbers = #tpu.dot_dimension_numbers<[1], [0], [0], [1], [0, 0, 1, 1], [], []>} : vector<1x50xf32>, vector<50x10xf32>, vector<1x10xf32> -> vector<1x10xf32>
    %c0_36 = arith.constant 0 : index
    %c0_37 = arith.constant 0 : index
    %162 = vector.load %arg9[%c0_36, %c0_37] : memref<1x10xf32, #tpu.memory_space<vmem>>, vector<1x10xf32>
    %163 = arith.addf %161, %162 : vector<1x10xf32>
    %cst_38 = arith.constant dense<0xFF800000> : vector<1xf32>
    %164 = vector.multi_reduction <maximumf>, %163, %cst_38 [1] : vector<1x10xf32> to vector<1xf32>
    %165 = vector.shape_cast %164 : vector<1xf32> to vector<1x1xf32>
    %166 = vector.broadcast %165 : vector<1x1xf32> to vector<1x10xf32>
    %167 = arith.subf %163, %166 : vector<1x10xf32>
    %168 = math.exp %167 : vector<1x10xf32>
    %cst_39 = arith.constant dense<0.000000e+00> : vector<1xf32>
    %169 = vector.multi_reduction <add>, %168, %cst_39 [1] : vector<1x10xf32> to vector<1xf32>
    %170 = vector.shape_cast %169 : vector<1xf32> to vector<1x1xf32>
    %171 = math.log %170 : vector<1x1xf32>
    %172 = vector.broadcast %171 : vector<1x1xf32> to vector<1x10xf32>
    %173 = arith.subf %167, %172 : vector<1x10xf32>
    %c0_40 = arith.constant 0 : index
    %c0_41 = arith.constant 0 : index
    %c0_42 = arith.constant 0 : index
    %174 = vector.load %arg10[%c0_40, %c0_41, %c0_42] : memref<1x1x10xf32, #tpu.memory_space<vmem>>, vector<1x1x10xf32>
    %175 = vector.shape_cast %174 : vector<1x1x10xf32> to vector<1x10xf32>
    %176 = vector.shape_cast %173 : vector<1x10xf32> to vector<1x1x10xf32>
    tpu.vector_store %arg10[%c0_40, %c0_41, %c0_42], %176 {strides = array<i32>} : memref<1x1x10xf32, #tpu.memory_space<vmem>>, vector<1x1x10xf32>,
    return
  }
  func.func @transform_0(%arg0: i32) -> (i32, i32, i32, i32) {
    %c0_i32 = arith.constant 0 : i32
    %c0_i32_0 = arith.constant 0 : i32
    %c0_i32_1 = arith.constant 0 : i32
    %c0_i32_2 = arith.constant 0 : i32
    return %arg0, %c0_i32, %c0_i32_0, %c0_i32_1 : i32, i32, i32, i32
  }
  func.func @transform_1(%arg0: i32) -> (i32, i32) {
    %c0_i32 = arith.constant 0 : i32
    %c0_i32_0 = arith.constant 0 : i32
    %c0_i32_1 = arith.constant 0 : i32
    return %c0_i32, %c0_i32_0 : i32, i32
  }
  func.func @transform_2(%arg0: i32) -> (i32, i32) {
    %c0_i32 = arith.constant 0 : i32
    %c0_i32_0 = arith.constant 0 : i32
    %c0_i32_1 = arith.constant 0 : i32
    return %c0_i32, %c0_i32_0 : i32, i32
  }
  func.func @transform_3(%arg0: i32) -> (i32, i32) {
    %c0_i32 = arith.constant 0 : i32
    %c0_i32_0 = arith.constant 0 : i32
    %c0_i32_1 = arith.constant 0 : i32
    return %c0_i32, %c0_i32_0 : i32, i32
  }
  func.func @transform_4(%arg0: i32) -> (i32, i32) {
    %c0_i32 = arith.constant 0 : i32
    %c0_i32_0 = arith.constant 0 : i32
    %c0_i32_1 = arith.constant 0 : i32
    return %c0_i32, %c0_i32_0 : i32, i32
  }
  func.func @transform_5(%arg0: i32) -> (i32, i32, i32) {
    %c0_i32 = arith.constant 0 : i32
    %c0_i32_0 = arith.constant 0 : i32
    %c0_i32_1 = arith.constant 0 : i32
    %c0_i32_2 = arith.constant 0 : i32
    return %c0_i32, %c0_i32_0, %c0_i32_1 : i32, i32, i32
  }
  func.func @transform_6(%arg0: i32) -> (i32, i32) {
    %c0_i32 = arith.constant 0 : i32
    %c0_i32_0 = arith.constant 0 : i32
    %c0_i32_1 = arith.constant 0 : i32
    return %c0_i32, %c0_i32_0 : i32, i32
  }
  func.func @transform_7(%arg0: i32) -> (i32, i32) {
    %c0_i32 = arith.constant 0 : i32
    %c0_i32_0 = arith.constant 0 : i32
    %c0_i32_1 = arith.constant 0 : i32
    return %c0_i32, %c0_i32_0 : i32, i32
  }
  func.func @transform_8(%arg0: i32) -> (i32, i32) {
    %c0_i32 = arith.constant 0 : i32
    %c0_i32_0 = arith.constant 0 : i32
    %c0_i32_1 = arith.constant 0 : i32
    return %c0_i32, %c0_i32_0 : i32, i32
  }
  func.func @transform_9(%arg0: i32) -> (i32, i32, i32) {
    %c0_i32 = arith.constant 0 : i32
    %c0_i32_0 = arith.constant 0 : i32
    %c0_i32_1 = arith.constant 0 : i32
    return %arg0, %c0_i32, %c0_i32_0 : i32, i32, i32
  }
}

</mosaic_0001>

<llo_original>
// kernel: net_forward.1
$region0: #{net_forward.1}
  #allocation0 [shape = 'u32[]', space=smem, size = 0x4, offset = 0x4, fixed_abs, tag = 'smem constant byte address 0x4 - core index']
  #allocation1 [shape = 'u32[72,128]{1,0:T(1,128)}', space=vmem, size = 0x9000, scoped, tag = 'internal scratch']
  %s0 = inlined_call_operand.vmem [shape: f32[2,4,16,28], index: 0, kind: input, shape index: {}]
  %s1 = inlined_call_operand.hbm [shape: f32[28,1280], index: 1, kind: input, shape index: {}]
  %s2 = inlined_call_operand.vmem [shape: f32[1,128], index: 2, kind: input, shape index: {}]
  %s3 = inlined_call_operand.vmem [shape: f32[128,1280], index: 3, kind: input, shape index: {}]
  %s4 = inlined_call_operand.vmem [shape: f32[1,128], index: 4, kind: input, shape index: {}]
  %s5 = inlined_call_operand.vmem [shape: f32[4,128,50], index: 5, kind: input, shape index: {}]
  %s6 = inlined_call_operand.vmem [shape: f32[1,50], index: 6, kind: input, shape index: {}]
  %s7 = inlined_call_operand.vmem [shape: f32[50,10], index: 7, kind: input, shape index: {}]
  %s8 = inlined_call_operand.vmem [shape: f32[1,10], index: 8, kind: input, shape index: {}]
  %s9 = inlined_call_operand.hbm [shape: f32[2,1,10], index: 9, kind: output, shape index: {}]
  %s10 = sld [smem:[#allocation0]]
  $region73: #{net_forward.1} parent=0
    _
  %s12 = ssub.s32 1, %s10
  %s13 = scalar_select 0, %s12, %s10
  $region1: #{net_forward.1} parent=0
    #allocation2 [shape = 'u8[163840]{0}', space=vmem, size = 0x28000, scoped, tag = 'input window, operand 1, single buffered']
    #allocation3 [shape = 's32[2]{0}', space=sflag, size = 0x8, scoped, tag = 'scoped memory for net_forward.1']
    #allocation4 [shape = 's32[2]{0}', space=sflag, size = 0x8, scoped, tag = 'scoped memory for net_forward.1']
    #allocation5 [shape = 'u8[1024]{0}', space=vmem, size = 0x400, scoped, tag = 'output window, operand 0']
    %14 = vsyncpa [#allocation3], 0
    %15 = vsyncpa [#allocation4], 0
    %s16 = scalar_lea.sflag [#allocation4], 1
    %17 = vsyncpa %s16, 0
    loop: start=0, step=1, limit=4
    $region2: #{net_forward.1} parent=1 // loop_pre_header
      _
    $region3: #{net_forward.1} parent=1 // loop_header
      %s19 = sphi 0, %s23
      %p20 = scmp.ge.s32.totalorder %s19, 4
      %s29 = sphi 0, %s31
      %s32 = sphi 0, %s29
      %s33 = sphi 0, %s32
      %s49 = sphi 0, %s33
      %s53 = sphi 0, %s53
      %s55 = sphi 0, %s53
      %s56 = sphi 0, %s55
      %s70 = sphi 0, %s56
      %s74 = sphi 0, %s74
      %s76 = sphi 0, %s74
      %s77 = sphi 0, %s76
      %s91 = sphi 0, %s77
      %s95 = sphi 0, %s95
      %s97 = sphi 0, %s95
      %s98 = sphi 0, %s97
      %s112 = sphi 0, %s98
      %s116 = sphi 0, %s116
      %s118 = sphi 0, %s116
      %s119 = sphi 0, %s118
      %s133 = sphi 0, %s119
      %s137 = sphi 0, %s137
      %s139 = sphi 0, %s137
      %s140 = sphi 0, %s139
      %s154 = sphi 0, %s140
      %s158 = sphi 0, %s158
      %s160 = sphi 0, %s158
      %s161 = sphi 0, %s160
      %s175 = sphi 0, %s161
      %s179 = sphi 0, %s179
      %s181 = sphi 0, %s179
      %s182 = sphi 0, %s181
      %s196 = sphi 0, %s182
      %s200 = sphi 0, %s200
      %s202 = sphi 0, %s200
      %s203 = sphi 0, %s202
      %s217 = sphi 0, %s203
      %s223 = sphi 0, %s225
      %s226 = sphi 0, %s223
      %s227 = sphi 0, %s226
      %s243 = sphi 0, %s227
    $region4: #{net_forward.1} parent=1 // loop_header_branch
      %22 = sbr.rel (%p20) target = $region8
    $region5: #{net_forward.1} parent=1 // loop_body
      %s24 = ssub.s32 %s19, 1
      %s25 = ssub.s32 %s19, 2
      %s26 = sadd.s32 %s19, 1
      %s27 = ssub.s32 %s19, %s26
      %p28 = scmp.eq.s32.totalorder %s27, 0
      %s30 = sadd.s32 %s29, 1
      %s31 = scalar_select %p28, %s29, %s30
      %p34 = pneg %p28
      %p35 = scmp.eq.s32.totalorder %s19, 1
      %p36 = por %p34, %p35
      %p37 = scmp.ne.s32.totalorder %s29, %s32
      %p38 = scmp.eq.s32.totalorder %s19, 0
      %p39 = por %p37, %p38
      %p40 = scmp.ne.s32.totalorder %s29, %s32
      %p41 = scmp.eq.s32.totalorder %s24, 1
      %p42 = por %p40, %p41
      %p43 = scmp.ne.s32.totalorder %s32, %s33
      %p44 = scmp.eq.s32.totalorder %s24, 0
      %p45 = por %p43, %p44
      %p46 = scmp.ne.s32.totalorder %s32, %s33
      %p47 = scmp.eq.s32.totalorder %s25, 1
      %p48 = por %p46, %p47
      %p50 = scmp.ne.s32.totalorder %s33, %s49
      %p51 = scmp.eq.s32.totalorder %s25, 0
      %p52 = por %p50, %p51
      %s54 = sadd.s32 %s53, 1
      %p57 = scmp.eq.s32.totalorder %s19, 1
      %p58 = scmp.ne.s32.totalorder %s53, %s55
      %p59 = scmp.eq.s32.totalorder %s19, 0
      %p60 = por %p58, %p59
      %p61 = scmp.ne.s32.totalorder %s53, %s55
      %p62 = scmp.eq.s32.totalorder %s24, 1
      %p63 = por %p61, %p62
      %p64 = scmp.ne.s32.totalorder %s55, %s56
      %p65 = scmp.eq.s32.totalorder %s24, 0
      %p66 = por %p64, %p65
      %p67 = scmp.ne.s32.totalorder %s55, %s56
      %p68 = scmp.eq.s32.totalorder %s25, 1
      %p69 = por %p67, %p68
      %p71 = scmp.ne.s32.totalorder %s56, %s70
      %p72 = scmp.eq.s32.totalorder %s25, 0
      %p73 = por %p71, %p72
      %s75 = sadd.s32 %s74, 1
      %p78 = scmp.eq.s32.totalorder %s19, 1
      %p79 = scmp.ne.s32.totalorder %s74, %s76
      %p80 = scmp.eq.s32.totalorder %s19, 0
      %p81 = por %p79, %p80
      %p82 = scmp.ne.s32.totalorder %s74, %s76
      %p83 = scmp.eq.s32.totalorder %s24, 1
      %p84 = por %p82, %p83
      %p85 = scmp.ne.s32.totalorder %s76, %s77
      %p86 = scmp.eq.s32.totalorder %s24, 0
      %p87 = por %p85, %p86
      %p88 = scmp.ne.s32.totalorder %s76, %s77
      %p89 = scmp.eq.s32.totalorder %s25, 1
      %p90 = por %p88, %p89
      %p92 = scmp.ne.s32.totalorder %s77, %s91
      %p93 = scmp.eq.s32.totalorder %s25, 0
      %p94 = por %p92, %p93
      %s96 = sadd.s32 %s95, 1
      %p99 = scmp.eq.s32.totalorder %s19, 1
      %p100 = scmp.ne.s32.totalorder %s95, %s97
      %p101 = scmp.eq.s32.totalorder %s19, 0
      %p102 = por %p100, %p101
      %p103 = scmp.ne.s32.totalorder %s95, %s97
      %p104 = scmp.eq.s32.totalorder %s24, 1
      %p105 = por %p103, %p104
      %p106 = scmp.ne.s32.totalorder %s97, %s98
      %p107 = scmp.eq.s32.totalorder %s24, 0
      %p108 = por %p106, %p107
      %p109 = scmp.ne.s32.totalorder %s97, %s98
      %p110 = scmp.eq.s32.totalorder %s25, 1
      %p111 = por %p109, %p110
      %p113 = scmp.ne.s32.totalorder %s98, %s112
      %p114 = scmp.eq.s32.totalorder %s25, 0
      %p115 = por %p113, %p114
      %s117 = sadd.s32 %s116, 1
      %p120 = scmp.eq.s32.totalorder %s19, 1
      %p121 = scmp.ne.s32.totalorder %s116, %s118
      %p122 = scmp.eq.s32.totalorder %s19, 0
      %p123 = por %p121, %p122
      %p124 = scmp.ne.s32.totalorder %s116, %s118
      %p125 = scmp.eq.s32.totalorder %s24, 1
      %p126 = por %p124, %p125
      %p127 = scmp.ne.s32.totalorder %s118, %s119
      %p128 = scmp.eq.s32.totalorder %s24, 0
      %p129 = por %p127, %p128
      %p130 = scmp.ne.s32.totalorder %s118, %s119
      %p131 = scmp.eq.s32.totalorder %s25, 1
      %p132 = por %p130, %p131
      %p134 = scmp.ne.s32.totalorder %s119, %s133
      %p135 = scmp.eq.s32.totalorder %s25, 0
      %p136 = por %p134, %p135
      %s138 = sadd.s32 %s137, 1
      %p141 = scmp.eq.s32.totalorder %s19, 1
      %p142 = scmp.ne.s32.totalorder %s137, %s139
      %p143 = scmp.eq.s32.totalorder %s19, 0
      %p144 = por %p142, %p143
      %p145 = scmp.ne.s32.totalorder %s137, %s139
      %p146 = scmp.eq.s32.totalorder %s24, 1
      %p147 = por %p145, %p146
      %p148 = scmp.ne.s32.totalorder %s139, %s140
      %p149 = scmp.eq.s32.totalorder %s24, 0
      %p150 = por %p148, %p149
      %p151 = scmp.ne.s32.totalorder %s139, %s140
      %p152 = scmp.eq.s32.totalorder %s25, 1
      %p153 = por %p151, %p152
      %p155 = scmp.ne.s32.totalorder %s140, %s154
      %p156 = scmp.eq.s32.totalorder %s25, 0
      %p157 = por %p155, %p156
      %s159 = sadd.s32 %s158, 1
      %p162 = scmp.eq.s32.totalorder %s19, 1
      %p163 = scmp.ne.s32.totalorder %s158, %s160
      %p164 = scmp.eq.s32.totalorder %s19, 0
      %p165 = por %p163, %p164
      %p166 = scmp.ne.s32.totalorder %s158, %s160
      %p167 = scmp.eq.s32.totalorder %s24, 1
      %p168 = por %p166, %p167
      %p169 = scmp.ne.s32.totalorder %s160, %s161
      %p170 = scmp.eq.s32.totalorder %s24, 0
      %p171 = por %p169, %p170
      %p172 = scmp.ne.s32.totalorder %s160, %s161
      %p173 = scmp.eq.s32.totalorder %s25, 1
      %p174 = por %p172, %p173
      %p176 = scmp.ne.s32.totalorder %s161, %s175
      %p177 = scmp.eq.s32.totalorder %s25, 0
      %p178 = por %p176, %p177
      %s180 = sadd.s32 %s179, 1
      %p183 = scmp.eq.s32.totalorder %s19, 1
      %p184 = scmp.ne.s32.totalorder %s179, %s181
      %p185 = scmp.eq.s32.totalorder %s19, 0
      %p186 = por %p184, %p185
      %p187 = scmp.ne.s32.totalorder %s179, %s181
      %p188 = scmp.eq.s32.totalorder %s24, 1
      %p189 = por %p187, %p188
      %p190 = scmp.ne.s32.totalorder %s181, %s182
      %p191 = scmp.eq.s32.totalorder %s24, 0
      %p192 = por %p190, %p191
      %p193 = scmp.ne.s32.totalorder %s181, %s182
      %p194 = scmp.eq.s32.totalorder %s25, 1
      %p195 = por %p193, %p194
      %p197 = scmp.ne.s32.totalorder %s182, %s196
      %p198 = scmp.eq.s32.totalorder %s25, 0
      %p199 = por %p197, %p198
      %s201 = sadd.s32 %s200, 1
      %p204 = scmp.eq.s32.totalorder %s19, 1
      %p205 = scmp.ne.s32.totalorder %s200, %s202
      %p206 = scmp.eq.s32.totalorder %s19, 0
      %p207 = por %p205, %p206
      %p208 = scmp.ne.s32.totalorder %s200, %s202
      %p209 = scmp.eq.s32.totalorder %s24, 1
      %p210 = por %p208, %p209
      %p211 = scmp.ne.s32.totalorder %s202, %s203
      %p212 = scmp.eq.s32.totalorder %s24, 0
      %p213 = por %p211, %p212
      %p214 = scmp.ne.s32.totalorder %s202, %s203
      %p215 = scmp.eq.s32.totalorder %s25, 1
      %p216 = por %p214, %p215
      %p218 = scmp.ne.s32.totalorder %s203, %s217
      %p219 = scmp.eq.s32.totalorder %s25, 0
      %p220 = por %p218, %p219
      %s221 = ssub.s32 %s19, %s26
      %p222 = scmp.eq.s32.totalorder %s221, 0
      %s224 = sadd.s32 %s223, 1
      %s225 = scalar_select %p222, %s223, %s224
      %p228 = pneg %p222
      %p229 = scmp.eq.s32.totalorder %s19, 1
      %p230 = por %p228, %p229
      %p231 = scmp.ne.s32.totalorder %s223, %s226
      %p232 = scmp.eq.s32.totalorder %s19, 0
      %p233 = por %p231, %p232
      %p234 = scmp.ne.s32.totalorder %s223, %s226
      %p235 = scmp.eq.s32.totalorder %s24, 1
      %p236 = por %p234, %p235
      %p237 = scmp.ne.s32.totalorder %s226, %s227
      %p238 = scmp.eq.s32.totalorder %s24, 0
      %p239 = por %p237, %p238
      %p240 = scmp.ne.s32.totalorder %s226, %s227
      %p241 = scmp.eq.s32.totalorder %s25, 1
      %p242 = por %p240, %p241
      %p244 = scmp.ne.s32.totalorder %s227, %s243
      %p245 = scmp.eq.s32.totalorder %s25, 0
      %p246 = por %p244, %p245
      %p247 = scmp.le.s32.totalorder 1, %s19
      %p248 = scmp.lt.s32.totalorder %s19, 3
      %p249 = pnand %p247, %p248
      %p250 = pneg %p249
      // Predicated region
      $region9: #{net_forward.1} parent=5 // pred_check
        _
      $region10: #{net_forward.1} parent=5 // pred_check_branch
        %252 = sbr.rel (%p249) target = $region12
      $region11: #{net_forward.1} parent=5 // pred_region
        %s253 = ssub.s32 %s19, 1
        // Predicated region
        $region13: #{net_forward.1} parent=11 // pred_check
          %p254 = pneg %p66
        $region14: #{net_forward.1} parent=11 // pred_check_branch
          %256 = sbr.rel (%p254) target = $region16
        $region15: #{net_forward.1} parent=11 // pred_region
          %258 = vsyncadd [#allocation3], 0
          %s259 = sshll.u32 %s1, 4
          %s260 = int_to_ptr.hbm [resolvable:$true] %s259
          %s261 = sshll.u32 [#allocation2], 4
          %s262 = int_to_ptr.vmem [resolvable:$true] %s261
          %267 = dma.hbm_to_vmem [thread:$0]  %s260, 5120, %s262, [#allocation3], 1280, 1280, 80
        $region16: #{net_forward.1} parent=11 // pred_fallthru
          _
        // Predicated region
        $region17: #{net_forward.1} parent=11 // pred_check
          %p268 = pneg %p87
        $region18: #{net_forward.1} parent=11 // pred_check_branch
          %270 = sbr.rel (%p268) target = $region20
        $region19: #{net_forward.1} parent=11 // pred_region
          _
        $region20: #{net_forward.1} parent=11 // pred_fallthru
          _
        // Predicated region
        $region21: #{net_forward.1} parent=11 // pred_check
          %p271 = pneg %p108
        $region22: #{net_forward.1} parent=11 // pred_check_branch
          %273 = sbr.rel (%p271) target = $region24
        $region23: #{net_forward.1} parent=11 // pred_region
          _
        $region24: #{net_forward.1} parent=11 // pred_fallthru
          _
        // Predicated region
        $region25: #{net_forward.1} parent=11 // pred_check
          %p274 = pneg %p129
        $region26: #{net_forward.1} parent=11 // pred_check_branch
          %276 = sbr.rel (%p274) target = $region28
        $region27: #{net_forward.1} parent=11 // pred_region
          _
        $region28: #{net_forward.1} parent=11 // pred_fallthru
          _
        // Predicated region
        $region29: #{net_forward.1} parent=11 // pred_check
          %p277 = pneg %p150
        $region30: #{net_forward.1} parent=11 // pred_check_branch
          %279 = sbr.rel (%p277) target = $region32
        $region31: #{net_forward.1} parent=11 // pred_region
          _
        $region32: #{net_forward.1} parent=11 // pred_fallthru
          _
        // Predicated region
        $region33: #{net_forward.1} parent=11 // pred_check
          %p280 = pneg %p171
        $region34: #{net_forward.1} parent=11 // pred_check_branch
          %282 = sbr.rel (%p280) target = $region36
        $region35: #{net_forward.1} parent=11 // pred_region
          _
        $region36: #{net_forward.1} parent=11 // pred_fallthru
          _
        // Predicated region
        $region37: #{net_forward.1} parent=11 // pred_check
          %p283 = pneg %p192
        $region38: #{net_forward.1} parent=11 // pred_check_branch
          %285 = sbr.rel (%p283) target = $region40
        $region39: #{net_forward.1} parent=11 // pred_region
          _
        $region40: #{net_forward.1} parent=11 // pred_fallthru
          _
        // Predicated region
        $region41: #{net_forward.1} parent=11 // pred_check
          %p286 = pneg %p213
        $region42: #{net_forward.1} parent=11 // pred_check_branch
          %288 = sbr.rel (%p286) target = $region44
        $region43: #{net_forward.1} parent=11 // pred_region
          _
        $region44: #{net_forward.1} parent=11 // pred_fallthru
          _
      $region12: #{net_forward.1} parent=5 // pred_fallthru
        _
      %p289 = scmp.lt.s32.totalorder %s19, 2
      // Predicated region
      $region45: #{net_forward.1} parent=5 // pred_check
        %p290 = pneg %p289
      $region46: #{net_forward.1} parent=5 // pred_check_branch
        %292 = sbr.rel (%p290) target = $region48
      $region47: #{net_forward.1} parent=5 // pred_region
        // Predicated region
        $region49: #{net_forward.1} parent=47 // pred_check
          %p293 = pneg %p39
        $region50: #{net_forward.1} parent=47 // pred_check_branch
          %295 = sbr.rel (%p293) target = $region52
        $region51: #{net_forward.1} parent=47 // pred_region
          %p296 = scmp.lt.s32.totalorder %s19, 1
          %s297 = scalar_select %p296, %s19, 1
          %s298 = smul.addr %s297, 8
          %s299 = smul.addr %s298, 8
          %s300 = scalar_lea.vmem %s0, %s299
        $region52: #{net_forward.1} parent=47 // pred_fallthru
          _
      $region48: #{net_forward.1} parent=5 // pred_fallthru
        _
      %p301 = scmp.le.s32.totalorder 1, %s19
      %p302 = scmp.lt.s32.totalorder %s19, 3
      %p303 = pnand %p301, %p302
      %p304 = pneg %p303
      // Predicated region
      $region53: #{net_forward.1} parent=5 // pred_check
        _
      $region54: #{net_forward.1} parent=5 // pred_check_branch
        %306 = sbr.rel (%p303) target = $region56
      $region55: #{net_forward.1} parent=5 // pred_region
        %s307 = ssub.s32 %s19, 1
        // Predicated region
        $region57: #{net_forward.1} parent=55 // pred_check
          %p308 = pneg %p66
        $region58: #{net_forward.1} parent=55 // pred_check_branch
          %310 = sbr.rel (%p308) target = $region60
        $region59: #{net_forward.1} parent=55 // pred_region
          %312 = dma.done [#allocation3], 5120
        $region60: #{net_forward.1} parent=55 // pred_fallthru
          _
        %p313 = scmp.lt.s32.totalorder %s24, 1
        %s314 = scalar_select %p313, %s24, 1
        %s315 = smul.addr %s314, 8
        %s316 = smul.addr %s315, 8
        %s317 = scalar_lea.vmem %s0, %s316
        %p318 = pneg %p45
        %p319 = pneg %p42
        %p320 = pneg %p66
        %p321 = pneg %p63
        %p322 = pneg %p87
        %p323 = pneg %p84
        %p324 = pneg %p108
        %p325 = pneg %p105
        %p326 = pneg %p129
        %p327 = pneg %p126
        %p328 = pneg %p150
        %p329 = pneg %p147
        %p330 = pneg %p171
        %p331 = pneg %p168
        %p332 = pneg %p192
        %p333 = pneg %p189
        %p334 = pneg %p213
        %p335 = pneg %p210
        %p336 = pneg %p239
        %p337 = pneg %p236
        %s338 = sand.u32 %s226, 1
        %s339 = scalar_lea.sflag [#allocation4], %s338
        %s340 = sand.u32 %s226, 1
        %s341 = scalar_lea.vmem [#allocation5], %s340
        %p342 = scmp.lt.s32.totalorder %s24, 1
        %s343 = scalar_select %p342, %s24, 1
        %s344 = smul.addr %s343, 8
        %s345 = smul.addr %s344, 8
        %s346 = scalar_lea.vmem %s0, %s345
        %v347 = vld [vmem:[%s346] sm:$0xff]
        %v348 = vld [vmem:[%s346 + $0x8] sm:$0xff]
        %v349 = vld [vmem:[%s346 + $0x10] sm:$0xff]
        %v350 = vld [vmem:[%s346 + $0x18] sm:$0xff]
        %v351 = vld [vmem:[%s346 + $0x20] sm:$0xff]
        %v352 = vld [vmem:[%s346 + $0x28] sm:$0xff]
        %v353 = vld [vmem:[%s346 + $0x30] sm:$0xff]
        %v354 = vld [vmem:[%s346 + $0x38] sm:$0xff]
        %v355 = vld [vmem:[#allocation2] sm:$0xff]
        %v356 = vld [vmem:[#allocation2 + $0x8] sm:$0xff]
        %v357 = vld [vmem:[#allocation2 + $0x10] sm:$0xff]
        %v358 = vld [vmem:[#allocation2 + $0x18] sm:$0xff]
        %v359 = vld [vmem:[#allocation2 + $0x20] sm:$0xff]
        %v360 = vld [vmem:[#allocation2 + $0x28] sm:$0xff]
        %v361 = vld [vmem:[#allocation2 + $0x30] sm:$0xff]
        %v362 = vld [vmem:[#allocation2 + $0x38] sm:$0xff]
        %v363 = vld [vmem:[#allocation2 + $0x40] sm:$0xff]
        %v364 = vld [vmem:[#allocation2 + $0x48] sm:$0xff]
        %v365 = vld [vmem:[#allocation2 + $0x50] sm:$0xff]
        %v366 = vld [vmem:[#allocation2 + $0x58] sm:$0xff]
        %v367 = vld [vmem:[#allocation2 + $0x60] sm:$0xff]
        %v368 = vld [vmem:[#allocation2 + $0x68] sm:$0xff]
        %v369 = vld [vmem:[#allocation2 + $0x70] sm:$0xff]
        %v370 = vld [vmem:[#allocation2 + $0x78] sm:$0xff]
        %v371 = vld [vmem:[#allocation2 + $0x80] sm:$0xff]
        %v372 = vld [vmem:[#allocation2 + $0x88] sm:$0xff]
        %v373 = vld [vmem:[#allocation2 + $0x90] sm:$0xff]
        %v374 = vld [vmem:[#allocation2 + $0x98] sm:$0xff]
        %v375 = vld [vmem:[#allocation2 + $0xa0] sm:$0xff]
        %v376 = vld [vmem:[#allocation2 + $0xa8] sm:$0xff]
        %v377 = vld [vmem:[#allocation2 + $0xb0] sm:$0xff]
        %v378 = vld [vmem:[#allocation2 + $0xb8] sm:$0xff]
        %v379 = vld [vmem:[#allocation2 + $0xc0] sm:$0xff]
        %v380 = vld [vmem:[#allocation2 + $0xc8] sm:$0xff]
        %v381 = vld [vmem:[#allocation2 + $0xd0] sm:$0xff]
        %v382 = vld [vmem:[#allocation2 + $0xd8] sm:$0xff]
        %v383 = vld [vmem:[#allocation2 + $0xe0] sm:$0xff]
        %v384 = vld [vmem:[#allocation2 + $0xe8] sm:$0xff]
        %v385 = vld [vmem:[#allocation2 + $0xf0] sm:$0xf]
        %v386 = vld [vmem:[#allocation2 + $0xf8] sm:$0xf]
        %v387 = vld [vmem:[#allocation2 + $0x100] sm:$0xf]
        %v388 = vld [vmem:[#allocation2 + $0x108] sm:$0xf]
        %v389 = vld [vmem:[#allocation2 + $0x110] sm:$0xf]
        %v390 = vld [vmem:[#allocation2 + $0x118] sm:$0xf]
        %v391 = vld [vmem:[#allocation2 + $0x120] sm:$0xf]
        %v392 = vld [vmem:[#allocation2 + $0x128] sm:$0xf]
        %v393 = vld [vmem:[#allocation2 + $0x130] sm:$0xf]
        %v394 = vld [vmem:[#allocation2 + $0x138] sm:$0xf]
        %vm395 = vcmask 228352
        %v397 = vsel %vm395, %v347, 0
        %v400 = vsel %vm395, %v348, 0
        %v403 = vsel %vm395, %v349, 0
        %v406 = vsel %vm395, %v350, 0
        %v409 = vsel %vm395, %v351, 0
        %v412 = vsel %vm395, %v352, 0
        %v415 = vsel %vm395, %v353, 0
        %v418 = vsel %vm395, %v354, 0
        %vm420 = vcmask 1043456
        %v422 = vsel %vm420, %v385, 0
        %v425 = vsel %vm420, %v386, 0
        %v428 = vsel %vm420, %v387, 0
        %v431 = vsel %vm420, %v388, 0
        %v434 = vsel %vm420, %v389, 0
        %v437 = vsel %vm420, %v390, 0
        %v440 = vsel %vm420, %v391, 0
        %v443 = vsel %vm420, %v392, 0
        %v446 = vsel %vm420, %v393, 0
        %v449 = vsel %vm420, %v394, 0
        %451 = vmatpush.msra.mxu0 0.0
        %452 = vmatpush.msra.mxu0 0.0
        %453 = vmatpush.msra.mxu0 0.0
        %454 = vmatpush.msra.mxu0 0.0
        %455 = vmatpush.msra.mxu0 0.0
        %456 = vmatpush.msra.mxu0 0.0
        %457 = vmatpush.msra.mxu0 0.0
        %458 = vmatpush.msra.mxu0 0.0
        %459 = vmatpush.msra.mxu0 0.0
        %460 = vmatpush.msra.mxu0 0.0
        %461 = vmatpush.msra.mxu0 0.0
        %462 = vmatpush.msra.mxu0 0.0
        %463 = vmatpush.msra.mxu0 %v422
        %464 = vmatpush.msra.mxu0 %v375
        %465 = vmatpush.msra.mxu0 %v365
        %466 = vmatpush.msra.mxu0 %v355
        %467 = vmatmul.f32.gmra.mxu0 %v397
        %v468 = vpop.f32.mrf.mxu0
        %v469 = vadd.f32 0.0, %v468
        %470 = vmatmul.f32.gmra.mxu0 %v400
        %v471 = vpop.f32.mrf.mxu0
        %472 = vmatmul.f32.gmra.mxu0 %v403
        %v473 = vpop.f32.mrf.mxu0
        %v474 = vadd.f32 0.0, %v473
        %475 = vmatmul.f32.gmra.mxu0 %v406
        %v476 = vpop.f32.mrf.mxu0
        %477 = vmatmul.f32.gmra.mxu0 %v409
        %v478 = vpop.f32.mrf.mxu0
        %v479 = vadd.f32 0.0, %v478
        %480 = vmatmul.f32.gmra.mxu0 %v412
        %v481 = vpop.f32.mrf.mxu0
        %482 = vmatmul.f32.gmra.mxu0 %v415
        %v483 = vpop.f32.mrf.mxu0
        %v484 = vadd.f32 0.0, %v483
        %485 = vmatmul.f32.gmra.mxu0 %v418
        %v486 = vpop.f32.mrf.mxu0
        %487 = vdwg.mxu0
        %488 = vmatpush.msra.mxu0 0.0
        %489 = vmatpush.msra.mxu0 0.0
        %490 = vmatpush.msra.mxu0 0.0
        %491 = vmatpush.msra.mxu0 0.0
        %492 = vmatpush.msra.mxu0 0.0
        %493 = vmatpush.msra.mxu0 0.0
        %494 = vmatpush.msra.mxu0 0.0
        %495 = vmatpush.msra.mxu0 0.0
        %496 = vmatpush.msra.mxu0 0.0
        %497 = vmatpush.msra.mxu0 0.0
        %498 = vmatpush.msra.mxu0 0.0
        %499 = vmatpush.msra.mxu0 0.0
        %500 = vmatpush.msra.mxu0 %v425
        %501 = vmatpush.msra.mxu0 %v376
        %502 = vmatpush.msra.mxu0 %v366
        %503 = vmatpush.msra.mxu0 %v356
        %504 = vmatmul.f32.gmra.mxu0 %v397
        %v505 = vpop.f32.mrf.mxu0
        %v506 = vadd.f32 0.0, %v505
        %507 = vmatmul.f32.gmra.mxu0 %v400
        %v508 = vpop.f32.mrf.mxu0
        %509 = vmatmul.f32.gmra.mxu0 %v403
        %v510 = vpop.f32.mrf.mxu0
        %v511 = vadd.f32 0.0, %v510
        %512 = vmatmul.f32.gmra.mxu0 %v406
        %v513 = vpop.f32.mrf.mxu0
        %514 = vmatmul.f32.gmra.mxu0 %v409
        %v515 = vpop.f32.mrf.mxu0
        %v516 = vadd.f32 0.0, %v515
        %517 = vmatmul.f32.gmra.mxu0 %v412
        %v518 = vpop.f32.mrf.mxu0
        %519 = vmatmul.f32.gmra.mxu0 %v415
        %v520 = vpop.f32.mrf.mxu0
        %v521 = vadd.f32 0.0, %v520
        %522 = vmatmul.f32.gmra.mxu0 %v418
        %v523 = vpop.f32.mrf.mxu0
        %524 = vdwg.mxu0
        %525 = vmatpush.msra.mxu0 0.0
        %526 = vmatpush.msra.mxu0 0.0
        %527 = vmatpush.msra.mxu0 0.0
        %528 = vmatpush.msra.mxu0 0.0
        %529 = vmatpush.msra.mxu0 0.0
        %530 = vmatpush.msra.mxu0 0.0
        %531 = vmatpush.msra.mxu0 0.0
        %532 = vmatpush.msra.mxu0 0.0
        %533 = vmatpush.msra.mxu0 0.0
        %534 = vmatpush.msra.mxu0 0.0
        %535 = vmatpush.msra.mxu0 0.0
        %536 = vmatpush.msra.mxu0 0.0
        %537 = vmatpush.msra.mxu0 %v428
        %538 = vmatpush.msra.mxu0 %v377
        %539 = vmatpush.msra.mxu0 %v367
        %540 = vmatpush.msra.mxu0 %v357
        %541 = vmatmul.f32.gmra.mxu0 %v397
        %v542 = vpop.f32.mrf.mxu0
        %v543 = vadd.f32 0.0, %v542
        %544 = vmatmul.f32.gmra.mxu0 %v400
        %v545 = vpop.f32.mrf.mxu0
        %v546 = vadd.f32 0.0, %v545
        %547 = vmatmul.f32.gmra.mxu0 %v403
        %v548 = vpop.f32.mrf.mxu0
        %v549 = vadd.f32 0.0, %v548
        %550 = vmatmul.f32.gmra.mxu0 %v406
        %v551 = vpop.f32.mrf.mxu0
        %552 = vmatmul.f32.gmra.mxu0 %v409
        %v553 = vpop.f32.mrf.mxu0
        %v554 = vadd.f32 0.0, %v553
        %555 = vmatmul.f32.gmra.mxu0 %v412
        %v556 = vpop.f32.mrf.mxu0
        %557 = vmatmul.f32.gmra.mxu0 %v415
        %v558 = vpop.f32.mrf.mxu0
        %v559 = vadd.f32 0.0, %v558
        %560 = vmatmul.f32.gmra.mxu0 %v418
        %v561 = vpop.f32.mrf.mxu0
        %562 = vdwg.mxu0
        %563 = vmatpush.msra.mxu0 0.0
        %564 = vmatpush.msra.mxu0 0.0
        %565 = vmatpush.msra.mxu0 0.0
        %566 = vmatpush.msra.mxu0 0.0
        %567 = vmatpush.msra.mxu0 0.0
        %568 = vmatpush.msra.mxu0 0.0
        %569 = vmatpush.msra.mxu0 0.0
        %570 = vmatpush.msra.mxu0 0.0
        %571 = vmatpush.msra.mxu0 0.0
        %572 = vmatpush.msra.mxu0 0.0
        %573 = vmatpush.msra.mxu0 0.0
        %574 = vmatpush.msra.mxu0 0.0
        %575 = vmatpush.msra.mxu0 %v431
        %576 = vmatpush.msra.mxu0 %v378
        %577 = vmatpush.msra.mxu0 %v368
        %578 = vmatpush.msra.mxu0 %v358
        %579 = vmatmul.f32.gmra.mxu0 %v397
        %v580 = vpop.f32.mrf.mxu0
        %v581 = vadd.f32 0.0, %v580
        %582 = vmatmul.f32.gmra.mxu0 %v400
        %v583 = vpop.f32.mrf.mxu0
        %v584 = vadd.f32 0.0, %v583
        %585 = vmatmul.f32.gmra.mxu0 %v403
        %v586 = vpop.f32.mrf.mxu0
        %v587 = vadd.f32 0.0, %v586
        %588 = vmatmul.f32.gmra.mxu0 %v406
        %v589 = vpop.f32.mrf.mxu0
        %590 = vmatmul.f32.gmra.mxu0 %v409
        %v591 = vpop.f32.mrf.mxu0
        %v592 = vadd.f32 0.0, %v591
        %593 = vmatmul.f32.gmra.mxu0 %v412
        %v594 = vpop.f32.mrf.mxu0
        %595 = vmatmul.f32.gmra.mxu0 %v415
        %v596 = vpop.f32.mrf.mxu0
        %v597 = vadd.f32 0.0, %v596
        %598 = vmatmul.f32.gmra.mxu0 %v418
        %v599 = vpop.f32.mrf.mxu0
        %600 = vdwg.mxu0
        %601 = vmatpush.msra.mxu0 0.0
        %602 = vmatpush.msra.mxu0 0.0
        %603 = vmatpush.msra.mxu0 0.0
        %604 = vmatpush.msra.mxu0 0.0
        %605 = vmatpush.msra.mxu0 0.0
        %606 = vmatpush.msra.mxu0 0.0
        %607 = vmatpush.msra.mxu0 0.0
        %608 = vmatpush.msra.mxu0 0.0
        %609 = vmatpush.msra.mxu0 0.0
        %610 = vmatpush.msra.mxu0 0.0
        %611 = vmatpush.msra.mxu0 0.0
        %612 = vmatpush.msra.mxu0 0.0
        %613 = vmatpush.msra.mxu0 %v434
        %614 = vmatpush.msra.mxu0 %v379
        %615 = vmatpush.msra.mxu0 %v369
        %616 = vmatpush.msra.mxu0 %v359
        %617 = vmatmul.f32.gmra.mxu0 %v397
        %v618 = vpop.f32.mrf.mxu0
        %v619 = vadd.f32 0.0, %v618
        %620 = vmatmul.f32.gmra.mxu0 %v400
        %v621 = vpop.f32.mrf.mxu0
        %v622 = vadd.f32 0.0, %v621
        %623 = vmatmul.f32.gmra.mxu0 %v403
        %v624 = vpop.f32.mrf.mxu0
        %v625 = vadd.f32 0.0, %v624
        %626 = vmatmul.f32.gmra.mxu0 %v406
        %v627 = vpop.f32.mrf.mxu0
        %v628 = vadd.f32 0.0, %v627
        %629 = vmatmul.f32.gmra.mxu0 %v409
        %v630 = vpop.f32.mrf.mxu0
        %v631 = vadd.f32 0.0, %v630
        %632 = vmatmul.f32.gmra.mxu0 %v412
        %v633 = vpop.f32.mrf.mxu0
        %634 = vmatmul.f32.gmra.mxu0 %v415
        %v635 = vpop.f32.mrf.mxu0
        %v636 = vadd.f32 0.0, %v635
        %637 = vmatmul.f32.gmra.mxu0 %v418
        %v638 = vpop.f32.mrf.mxu0
        %639 = vdwg.mxu0
        %640 = vmatpush.msra.mxu0 0.0
        %641 = vmatpush.msra.mxu0 0.0
        %642 = vmatpush.msra.mxu0 0.0
        %643 = vmatpush.msra.mxu0 0.0
        %644 = vmatpush.msra.mxu0 0.0
        %645 = vmatpush.msra.mxu0 0.0
        %646 = vmatpush.msra.mxu0 0.0
        %647 = vmatpush.msra.mxu0 0.0
        %648 = vmatpush.msra.mxu0 0.0
        %649 = vmatpush.msra.mxu0 0.0
        %650 = vmatpush.msra.mxu0 0.0
        %651 = vmatpush.msra.mxu0 0.0
        %652 = vmatpush.msra.mxu0 %v437
        %653 = vmatpush.msra.mxu0 %v380
        %654 = vmatpush.msra.mxu0 %v370
        %655 = vmatpush.msra.mxu0 %v360
        %656 = vmatmul.f32.gmra.mxu0 %v397
        %v657 = vpop.f32.mrf.mxu0
        %v658 = vadd.f32 0.0, %v657
        %659 = vmatmul.f32.gmra.mxu0 %v400
        %v660 = vpop.f32.mrf.mxu0
        %v661 = vadd.f32 0.0, %v660
        %662 = vmatmul.f32.gmra.mxu0 %v403
        %v663 = vpop.f32.mrf.mxu0
        %v664 = vadd.f32 0.0, %v663
        %665 = vmatmul.f32.gmra.mxu0 %v406
        %v666 = vpop.f32.mrf.mxu0
        %v667 = vadd.f32 0.0, %v666
        %668 = vmatmul.f32.gmra.mxu0 %v409
        %v669 = vpop.f32.mrf.mxu0
        %v670 = vadd.f32 0.0, %v669
        %671 = vmatmul.f32.gmra.mxu0 %v412
        %v672 = vpop.f32.mrf.mxu0
        %673 = vmatmul.f32.gmra.mxu0 %v415
        %v674 = vpop.f32.mrf.mxu0
        %v675 = vadd.f32 0.0, %v674
        %676 = vmatmul.f32.gmra.mxu0 %v418
        %v677 = vpop.f32.mrf.mxu0
        %678 = vdwg.mxu0
        %679 = vmatpush.msra.mxu0 0.0
        %680 = vmatpush.msra.mxu0 0.0
        %681 = vmatpush.msra.mxu0 0.0
        %682 = vmatpush.msra.mxu0 0.0
        %683 = vmatpush.msra.mxu0 0.0
        %684 = vmatpush.msra.mxu0 0.0
        %685 = vmatpush.msra.mxu0 0.0
        %686 = vmatpush.msra.mxu0 0.0
        %687 = vmatpush.msra.mxu0 0.0
        %688 = vmatpush.msra.mxu0 0.0
        %689 = vmatpush.msra.mxu0 0.0
        %690 = vmatpush.msra.mxu0 0.0
        %691 = vmatpush.msra.mxu0 %v440
        %692 = vmatpush.msra.mxu0 %v381
        %693 = vmatpush.msra.mxu0 %v371
        %694 = vmatpush.msra.mxu0 %v361
        %695 = vmatmul.f32.gmra.mxu0 %v397
        %v696 = vpop.f32.mrf.mxu0
        %v697 = vadd.f32 0.0, %v696
        %698 = vmatmul.f32.gmra.mxu0 %v400
        %v699 = vpop.f32.mrf.mxu0
        %v700 = vadd.f32 0.0, %v699
        %701 = vmatmul.f32.gmra.mxu0 %v403
        %v702 = vpop.f32.mrf.mxu0
        %v703 = vadd.f32 0.0, %v702
        %704 = vmatmul.f32.gmra.mxu0 %v406
        %v705 = vpop.f32.mrf.mxu0
        %v706 = vadd.f32 0.0, %v705
        %707 = vmatmul.f32.gmra.mxu0 %v409
        %v708 = vpop.f32.mrf.mxu0
        %v709 = vadd.f32 0.0, %v708
        %710 = vmatmul.f32.gmra.mxu0 %v412
        %v711 = vpop.f32.mrf.mxu0
        %v712 = vadd.f32 0.0, %v711
        %713 = vmatmul.f32.gmra.mxu0 %v415
        %v714 = vpop.f32.mrf.mxu0
        %v715 = vadd.f32 0.0, %v714
        %716 = vmatmul.f32.gmra.mxu0 %v418
        %v717 = vpop.f32.mrf.mxu0
        %718 = vdwg.mxu0
        %719 = vmatpush.msra.mxu0 0.0
        %720 = vmatpush.msra.mxu0 0.0
        %721 = vmatpush.msra.mxu0 0.0
        %722 = vmatpush.msra.mxu0 0.0
        %723 = vmatpush.msra.mxu0 0.0
        %724 = vmatpush.msra.mxu0 0.0
        %725 = vmatpush.msra.mxu0 0.0
        %726 = vmatpush.msra.mxu0 0.0
        %727 = vmatpush.msra.mxu0 0.0
        %728 = vmatpush.msra.mxu0 0.0
        %729 = vmatpush.msra.mxu0 0.0
        %730 = vmatpush.msra.mxu0 0.0
        %731 = vmatpush.msra.mxu0 %v443
        %732 = vmatpush.msra.mxu0 %v382
        %733 = vmatpush.msra.mxu0 %v372
        %734 = vmatpush.msra.mxu0 %v362
        %735 = vmatmul.f32.gmra.mxu0 %v397
        %v736 = vpop.f32.mrf.mxu0
        %v737 = vadd.f32 0.0, %v736
        %738 = vmatmul.f32.gmra.mxu0 %v400
        %v739 = vpop.f32.mrf.mxu0
        %v740 = vadd.f32 0.0, %v739
        %741 = vmatmul.f32.gmra.mxu0 %v403
        %v742 = vpop.f32.mrf.mxu0
        %v743 = vadd.f32 0.0, %v742
        %744 = vmatmul.f32.gmra.mxu0 %v406
        %v745 = vpop.f32.mrf.mxu0
        %v746 = vadd.f32 0.0, %v745
        %747 = vmatmul.f32.gmra.mxu0 %v409
        %v748 = vpop.f32.mrf.mxu0
        %v749 = vadd.f32 0.0, %v748
        %750 = vmatmul.f32.gmra.mxu0 %v412
        %v751 = vpop.f32.mrf.mxu0
        %v752 = vadd.f32 0.0, %v751
        %753 = vmatmul.f32.gmra.mxu0 %v415
        %v754 = vpop.f32.mrf.mxu0
        %v755 = vadd.f32 0.0, %v754
        %756 = vmatmul.f32.gmra.mxu0 %v418
        %v757 = vpop.f32.mrf.mxu0
        %758 = vdwg.mxu0
        %759 = vmatpush.msra.mxu0 0.0
        %760 = vmatpush.msra.mxu0 0.0
        %761 = vmatpush.msra.mxu0 0.0
        %762 = vmatpush.msra.mxu0 0.0
        %763 = vmatpush.msra.mxu0 0.0
        %764 = vmatpush.msra.mxu0 0.0
        %765 = vmatpush.msra.mxu0 0.0
        %766 = vmatpush.msra.mxu0 0.0
        %767 = vmatpush.msra.mxu0 0.0
        %768 = vmatpush.msra.mxu0 0.0
        %769 = vmatpush.msra.mxu0 0.0
        %770 = vmatpush.msra.mxu0 0.0
        %771 = vmatpush.msra.mxu0 %v446
        %772 = vmatpush.msra.mxu0 %v383
        %773 = vmatpush.msra.mxu0 %v373
        %774 = vmatpush.msra.mxu0 %v363
        %775 = vmatmul.f32.gmra.mxu0 %v397
        %v776 = vpop.f32.mrf.mxu0
        %v777 = vadd.f32 0.0, %v776
        %778 = vmatmul.f32.gmra.mxu0 %v400
        %v779 = vpop.f32.mrf.mxu0
        %v780 = vadd.f32 0.0, %v779
        %781 = vmatmul.f32.gmra.mxu0 %v403
        %v782 = vpop.f32.mrf.mxu0
        %v783 = vadd.f32 0.0, %v782
        %784 = vmatmul.f32.gmra.mxu0 %v406
        %v785 = vpop.f32.mrf.mxu0
        %v786 = vadd.f32 0.0, %v785
        %787 = vmatmul.f32.gmra.mxu0 %v409
        %v788 = vpop.f32.mrf.mxu0
        %v789 = vadd.f32 0.0, %v788
        %790 = vmatmul.f32.gmra.mxu0 %v412
        %v791 = vpop.f32.mrf.mxu0
        %v792 = vadd.f32 0.0, %v791
        %793 = vmatmul.f32.gmra.mxu0 %v415
        %v794 = vpop.f32.mrf.mxu0
        %v795 = vadd.f32 0.0, %v794
        %796 = vmatmul.f32.gmra.mxu0 %v418
        %v797 = vpop.f32.mrf.mxu0
        %v798 = vadd.f32 0.0, %v797
        %799 = vdwg.mxu0
        %800 = vmatpush.msra.mxu0 0.0
        %801 = vmatpush.msra.mxu0 0.0
        %802 = vmatpush.msra.mxu0 0.0
        %803 = vmatpush.msra.mxu0 0.0
        %804 = vmatpush.msra.mxu0 0.0
        %805 = vmatpush.msra.mxu0 0.0
        %806 = vmatpush.msra.mxu0 0.0
        %807 = vmatpush.msra.mxu0 0.0
        %808 = vmatpush.msra.mxu0 0.0
        %809 = vmatpush.msra.mxu0 0.0
        %810 = vmatpush.msra.mxu0 0.0
        %811 = vmatpush.msra.mxu0 0.0
        %812 = vmatpush.msra.mxu0 %v449
        %813 = vmatpush.msra.mxu0 %v384
        %814 = vmatpush.msra.mxu0 %v374
        %815 = vmatpush.msra.mxu0 %v364
        %816 = vmatmul.f32.gmra.mxu0 %v397
        %v817 = vpop.f32.mrf.mxu0
        %v818 = vadd.f32 0.0, %v817
        %819 = vmatmul.f32.gmra.mxu0 %v400
        %v820 = vpop.f32.mrf.mxu0
        %v821 = vadd.f32 0.0, %v820
        %822 = vmatmul.f32.gmra.mxu0 %v403
        %v823 = vpop.f32.mrf.mxu0
        %v824 = vadd.f32 0.0, %v823
        %825 = vmatmul.f32.gmra.mxu0 %v406
        %v826 = vpop.f32.mrf.mxu0
        %v827 = vadd.f32 0.0, %v826
        %828 = vmatmul.f32.gmra.mxu0 %v409
        %v829 = vpop.f32.mrf.mxu0
        %v830 = vadd.f32 0.0, %v829
        %831 = vmatmul.f32.gmra.mxu0 %v412
        %v832 = vpop.f32.mrf.mxu0
        %v833 = vadd.f32 0.0, %v832
        %834 = vmatmul.f32.gmra.mxu0 %v415
        %v835 = vpop.f32.mrf.mxu0
        %v836 = vadd.f32 0.0, %v835
        %837 = vmatmul.f32.gmra.mxu0 %v418
        %v838 = vpop.f32.mrf.mxu0
        %v839 = vadd.f32 0.0, %v838
        %840 = vdwg.mxu0
        %v841 = vadd.f32 %v469, %v549
        %v842 = vadd.f32 %v506, %v587
        %v843 = vadd.f32 %v841, %v631
        %v844 = vadd.f32 %v842, %v670
        %v845 = vadd.f32 %v843, %v715
        %v846 = vadd.f32 %v844, %v755
        %vm851 = vcmask 1046528
        %v852 = vrot.slane %v777, 1
        %v853 = vrot.slane %v780, 1
        %v854 = vsel %vm851, %v852, %v853
        %v855 = vrot.slane %v818, 1
        %v856 = vrot.slane %v821, 1
        %v857 = vsel %vm851, %v855, %v856
        %v860 = vadd.f32 %v845, %v854
        %v861 = vadd.f32 %v846, %v857
        %v862 = vadd.f32 %v474, %v554
        %v863 = vadd.f32 %v511, %v592
        %v864 = vadd.f32 %v862, %v636
        %v865 = vadd.f32 %v863, %v675
        %v870 = vrot.slane %v697, 1
        %v871 = vrot.slane %v700, 1
        %v872 = vsel %vm851, %v870, %v871
        %v873 = vrot.slane %v737, 1
        %v874 = vrot.slane %v740, 1
        %v875 = vsel %vm851, %v873, %v874
        %v878 = vadd.f32 %v864, %v872
        %v879 = vadd.f32 %v865, %v875
        %v884 = vrot.slane %v783, 1
        %v885 = vrot.slane %v786, 1
        %v886 = vsel %vm851, %v884, %v885
        %v887 = vrot.slane %v824, 1
        %v888 = vrot.slane %v827, 1
        %v889 = vsel %vm851, %v887, %v888
        %v892 = vadd.f32 %v878, %v886
        %v893 = vadd.f32 %v879, %v889
        %v894 = vmax.f32 %v860, %v861
        %v895 = vmax.f32 %v892, %v893
        %v896 = vmax.f32 %v894, %v895
        %v897 = vld [vmem:[%s2] sm:$0x1]
        %v899 = vperm.slane %v897, 0
        %v901 = vadd.f32 %v896, %v899
        %v902 = vmax.f32 %v901, 0.0
        %v903 = vadd.f32 %v479, %v559
        %v904 = vadd.f32 %v516, %v597
        %v909 = vrot.slane %v619, 1
        %v910 = vrot.slane %v622, 1
        %v911 = vsel %vm851, %v909, %v910
        %v912 = vrot.slane %v658, 1
        %v913 = vrot.slane %v661, 1
        %v914 = vsel %vm851, %v912, %v913
        %v917 = vadd.f32 %v903, %v911
        %v918 = vadd.f32 %v904, %v914
        %v923 = vrot.slane %v703, 1
        %v924 = vrot.slane %v706, 1
        %v925 = vsel %vm851, %v923, %v924
        %v926 = vrot.slane %v743, 1
        %v927 = vrot.slane %v746, 1
        %v928 = vsel %vm851, %v926, %v927
        %v931 = vadd.f32 %v917, %v925
        %v932 = vadd.f32 %v918, %v928
        %v937 = vrot.slane %v789, 1
        %v938 = vrot.slane %v792, 1
        %v939 = vsel %vm851, %v937, %v938
        %v940 = vrot.slane %v830, 1
        %v941 = vrot.slane %v833, 1
        %v942 = vsel %vm851, %v940, %v941
        %v945 = vadd.f32 %v931, %v939
        %v946 = vadd.f32 %v932, %v942
        %v951 = vrot.slane %v543, 1
        %v952 = vrot.slane %v546, 1
        %v953 = vsel %vm851, %v951, %v952
        %v954 = vrot.slane %v581, 1
        %v955 = vrot.slane %v584, 1
        %v956 = vsel %vm851, %v954, %v955
        %v959 = vadd.f32 %v484, %v953
        %v960 = vadd.f32 %v521, %v956
        %v965 = vrot.slane %v625, 1
        %v966 = vrot.slane %v628, 1
        %v967 = vsel %vm851, %v965, %v966
        %v968 = vrot.slane %v664, 1
        %v969 = vrot.slane %v667, 1
        %v970 = vsel %vm851, %v968, %v969
        %v973 = vadd.f32 %v959, %v967
        %v974 = vadd.f32 %v960, %v970
        %v979 = vrot.slane %v709, 1
        %v980 = vrot.slane %v712, 1
        %v981 = vsel %vm851, %v979, %v980
        %v982 = vrot.slane %v749, 1
        %v983 = vrot.slane %v752, 1
        %v984 = vsel %vm851, %v982, %v983
        %v987 = vadd.f32 %v973, %v981
        %v988 = vadd.f32 %v974, %v984
        %v993 = vrot.slane %v795, 1
        %v994 = vrot.slane %v798, 1
        %v995 = vsel %vm851, %v993, %v994
        %v996 = vrot.slane %v836, 1
        %v997 = vrot.slane %v839, 1
        %v998 = vsel %vm851, %v996, %v997
        %v1001 = vadd.f32 %v987, %v995
        %v1002 = vadd.f32 %v988, %v998
        %v1003 = vmax.f32 %v945, %v946
        %v1004 = vmax.f32 %v1001, %v1002
        %v1005 = vmax.f32 %v1003, %v1004
        %v1006 = vadd.f32 %v1005, %v899
        %v1007 = vmax.f32 %v1006, 0.0
        %v1008 = vld [vmem:[%s3] sm:$0xff]
        %v1009 = vld [vmem:[%s3 + $0x8] sm:$0xff]
        %v1010 = vld [vmem:[%s3 + $0x10] sm:$0xff]
        %v1011 = vld [vmem:[%s3 + $0x18] sm:$0xff]
        %v1012 = vld [vmem:[%s3 + $0x20] sm:$0xff]
        %v1013 = vld [vmem:[%s3 + $0x28] sm:$0xff]
        %v1014 = vld [vmem:[%s3 + $0x30] sm:$0xff]
        %v1015 = vld [vmem:[%s3 + $0x38] sm:$0xff]
        %v1016 = vld [vmem:[%s3 + $0x40] sm:$0xff]
        %v1017 = vld [vmem:[%s3 + $0x48] sm:$0xff]
        %v1018 = vld [vmem:[%s3 + $0x50] sm:$0xff]
        %v1019 = vld [vmem:[%s3 + $0x58] sm:$0xff]
        %v1020 = vld [vmem:[%s3 + $0x60] sm:$0xff]
        %v1021 = vld [vmem:[%s3 + $0x68] sm:$0xff]
        %v1022 = vld [vmem:[%s3 + $0x70] sm:$0xff]
        %v1023 = vld [vmem:[%s3 + $0x78] sm:$0xff]
        %v1024 = vld [vmem:[%s3 + $0x80] sm:$0xff]
        %v1025 = vld [vmem:[%s3 + $0x88] sm:$0xff]
        %v1026 = vld [vmem:[%s3 + $0x90] sm:$0xff]
        %v1027 = vld [vmem:[%s3 + $0x98] sm:$0xff]
        %v1028 = vld [vmem:[%s3 + $0xa0] sm:$0xff]
        %v1029 = vld [vmem:[%s3 + $0xa8] sm:$0xff]
        %v1030 = vld [vmem:[%s3 + $0xb0] sm:$0xff]
        %v1031 = vld [vmem:[%s3 + $0xb8] sm:$0xff]
        %v1032 = vld [vmem:[%s3 + $0xc0] sm:$0xff]
        %v1033 = vld [vmem:[%s3 + $0xc8] sm:$0xff]
        %v1034 = vld [vmem:[%s3 + $0xd0] sm:$0xff]
        %v1035 = vld [vmem:[%s3 + $0xd8] sm:$0xff]
        %v1036 = vld [vmem:[%s3 + $0xe0] sm:$0xff]
        %v1037 = vld [vmem:[%s3 + $0xe8] sm:$0xff]
        %v1038 = vld [vmem:[%s3 + $0xf0] sm:$0xff]
        %v1039 = vld [vmem:[%s3 + $0xf8] sm:$0xff]
        %v1040 = vld [vmem:[%s3 + $0x100] sm:$0xff]
        %v1041 = vld [vmem:[%s3 + $0x108] sm:$0xff]
        %v1042 = vld [vmem:[%s3 + $0x110] sm:$0xff]
        %v1043 = vld [vmem:[%s3 + $0x118] sm:$0xff]
        %v1044 = vld [vmem:[%s3 + $0x120] sm:$0xff]
        %v1045 = vld [vmem:[%s3 + $0x128] sm:$0xff]
        %v1046 = vld [vmem:[%s3 + $0x130] sm:$0xff]
        %v1047 = vld [vmem:[%s3 + $0x138] sm:$0xff]
        %v1048 = vld [vmem:[%s3 + $0x140] sm:$0xff]
        %v1049 = vld [vmem:[%s3 + $0x148] sm:$0xff]
        %v1050 = vld [vmem:[%s3 + $0x150] sm:$0xff]
        %v1051 = vld [vmem:[%s3 + $0x158] sm:$0xff]
        %v1052 = vld [vmem:[%s3 + $0x160] sm:$0xff]
        %v1053 = vld [vmem:[%s3 + $0x168] sm:$0xff]
        %v1054 = vld [vmem:[%s3 + $0x170] sm:$0xff]
        %v1055 = vld [vmem:[%s3 + $0x178] sm:$0xff]
        %v1056 = vld [vmem:[%s3 + $0x180] sm:$0xff]
        %v1057 = vld [vmem:[%s3 + $0x188] sm:$0xff]
        %v1058 = vld [vmem:[%s3 + $0x190] sm:$0xff]
        %v1059 = vld [vmem:[%s3 + $0x198] sm:$0xff]
        %v1060 = vld [vmem:[%s3 + $0x1a0] sm:$0xff]
        %v1061 = vld [vmem:[%s3 + $0x1a8] sm:$0xff]
        %v1062 = vld [vmem:[%s3 + $0x1b0] sm:$0xff]
        %v1063 = vld [vmem:[%s3 + $0x1b8] sm:$0xff]
        %v1064 = vld [vmem:[%s3 + $0x1c0] sm:$0xff]
        %v1065 = vld [vmem:[%s3 + $0x1c8] sm:$0xff]
        %v1066 = vld [vmem:[%s3 + $0x1d0] sm:$0xff]
        %v1067 = vld [vmem:[%s3 + $0x1d8] sm:$0xff]
        %v1068 = vld [vmem:[%s3 + $0x1e0] sm:$0xff]
        %v1069 = vld [vmem:[%s3 + $0x1e8] sm:$0xff]
        %v1070 = vld [vmem:[%s3 + $0x1f0] sm:$0xff]
        %v1071 = vld [vmem:[%s3 + $0x1f8] sm:$0xff]
        %v1072 = vld [vmem:[%s3 + $0x200] sm:$0xff]
        %v1073 = vld [vmem:[%s3 + $0x208] sm:$0xff]
        %v1074 = vld [vmem:[%s3 + $0x210] sm:$0xff]
        %v1075 = vld [vmem:[%s3 + $0x218] sm:$0xff]
        %v1076 = vld [vmem:[%s3 + $0x220] sm:$0xff]
        %v1077 = vld [vmem:[%s3 + $0x228] sm:$0xff]
        %v1078 = vld [vmem:[%s3 + $0x230] sm:$0xff]
        %v1079 = vld [vmem:[%s3 + $0x238] sm:$0xff]
        %v1080 = vld [vmem:[%s3 + $0x240] sm:$0xff]
        %v1081 = vld [vmem:[%s3 + $0x248] sm:$0xff]
        %v1082 = vld [vmem:[%s3 + $0x250] sm:$0xff]
        %v1083 = vld [vmem:[%s3 + $0x258] sm:$0xff]
        %v1084 = vld [vmem:[%s3 + $0x260] sm:$0xff]
        %v1085 = vld [vmem:[%s3 + $0x268] sm:$0xff]
        %v1086 = vld [vmem:[%s3 + $0x270] sm:$0xff]
        %v1087 = vld [vmem:[%s3 + $0x278] sm:$0xff]
        %v1088 = vld [vmem:[%s3 + $0x280] sm:$0xff]
        %v1089 = vld [vmem:[%s3 + $0x288] sm:$0xff]
        %v1090 = vld [vmem:[%s3 + $0x290] sm:$0xff]
        %v1091 = vld [vmem:[%s3 + $0x298] sm:$0xff]
        %v1092 = vld [vmem:[%s3 + $0x2a0] sm:$0xff]
        %v1093 = vld [vmem:[%s3 + $0x2a8] sm:$0xff]
        %v1094 = vld [vmem:[%s3 + $0x2b0] sm:$0xff]
        %v1095 = vld [vmem:[%s3 + $0x2b8] sm:$0xff]
        %v1096 = vld [vmem:[%s3 + $0x2c0] sm:$0xff]
        %v1097 = vld [vmem:[%s3 + $0x2c8] sm:$0xff]
        %v1098 = vld [vmem:[%s3 + $0x2d0] sm:$0xff]
        %v1099 = vld [vmem:[%s3 + $0x2d8] sm:$0xff]
        %v1100 = vld [vmem:[%s3 + $0x2e0] sm:$0xff]
        %v1101 = vld [vmem:[%s3 + $0x2e8] sm:$0xff]
        %v1102 = vld [vmem:[%s3 + $0x2f0] sm:$0xff]
        %v1103 = vld [vmem:[%s3 + $0x2f8] sm:$0xff]
        %v1104 = vld [vmem:[%s3 + $0x300] sm:$0xff]
        %v1105 = vld [vmem:[%s3 + $0x308] sm:$0xff]
        %v1106 = vld [vmem:[%s3 + $0x310] sm:$0xff]
        %v1107 = vld [vmem:[%s3 + $0x318] sm:$0xff]
        %v1108 = vld [vmem:[%s3 + $0x320] sm:$0xff]
        %v1109 = vld [vmem:[%s3 + $0x328] sm:$0xff]
        %v1110 = vld [vmem:[%s3 + $0x330] sm:$0xff]
        %v1111 = vld [vmem:[%s3 + $0x338] sm:$0xff]
        %v1112 = vld [vmem:[%s3 + $0x340] sm:$0xff]
        %v1113 = vld [vmem:[%s3 + $0x348] sm:$0xff]
        %v1114 = vld [vmem:[%s3 + $0x350] sm:$0xff]
        %v1115 = vld [vmem:[%s3 + $0x358] sm:$0xff]
        %v1116 = vld [vmem:[%s3 + $0x360] sm:$0xff]
        %v1117 = vld [vmem:[%s3 + $0x368] sm:$0xff]
        %v1118 = vld [vmem:[%s3 + $0x370] sm:$0xff]
        %v1119 = vld [vmem:[%s3 + $0x378] sm:$0xff]
        %v1120 = vld [vmem:[%s3 + $0x380] sm:$0xff]
        %v1121 = vld [vmem:[%s3 + $0x388] sm:$0xff]
        %v1122 = vld [vmem:[%s3 + $0x390] sm:$0xff]
        %v1123 = vld [vmem:[%s3 + $0x398] sm:$0xff]
        %v1124 = vld [vmem:[%s3 + $0x3a0] sm:$0xff]
        %v1125 = vld [vmem:[%s3 + $0x3a8] sm:$0xff]
        %v1126 = vld [vmem:[%s3 + $0x3b0] sm:$0xff]
        %v1127 = vld [vmem:[%s3 + $0x3b8] sm:$0xff]
        %v1128 = vld [vmem:[%s3 + $0x3c0] sm:$0xff]
        %v1129 = vld [vmem:[%s3 + $0x3c8] sm:$0xff]
        %v1130 = vld [vmem:[%s3 + $0x3d0] sm:$0xff]
        %v1131 = vld [vmem:[%s3 + $0x3d8] sm:$0xff]
        %v1132 = vld [vmem:[%s3 + $0x3e0] sm:$0xff]
        %v1133 = vld [vmem:[%s3 + $0x3e8] sm:$0xff]
        %v1134 = vld [vmem:[%s3 + $0x3f0] sm:$0xff]
        %v1135 = vld [vmem:[%s3 + $0x3f8] sm:$0xff]
        %v1136 = vld [vmem:[%s3 + $0x400] sm:$0xff]
        %v1137 = vld [vmem:[%s3 + $0x408] sm:$0xff]
        %v1138 = vld [vmem:[%s3 + $0x410] sm:$0xff]
        %v1139 = vld [vmem:[%s3 + $0x418] sm:$0xff]
        %v1140 = vld [vmem:[%s3 + $0x420] sm:$0xff]
        %v1141 = vld [vmem:[%s3 + $0x428] sm:$0xff]
        %v1142 = vld [vmem:[%s3 + $0x430] sm:$0xff]
        %v1143 = vld [vmem:[%s3 + $0x438] sm:$0xff]
        %v1144 = vld [vmem:[%s3 + $0x440] sm:$0xff]
        %v1145 = vld [vmem:[%s3 + $0x448] sm:$0xff]
        %v1146 = vld [vmem:[%s3 + $0x450] sm:$0xff]
        %v1147 = vld [vmem:[%s3 + $0x458] sm:$0xff]
        %v1148 = vld [vmem:[%s3 + $0x460] sm:$0xff]
        %v1149 = vld [vmem:[%s3 + $0x468] sm:$0xff]
        %v1150 = vld [vmem:[%s3 + $0x470] sm:$0xff]
        %v1151 = vld [vmem:[%s3 + $0x478] sm:$0xff]
        %v1152 = vld [vmem:[%s3 + $0x480] sm:$0xff]
        %v1153 = vld [vmem:[%s3 + $0x488] sm:$0xff]
        %v1154 = vld [vmem:[%s3 + $0x490] sm:$0xff]
        %v1155 = vld [vmem:[%s3 + $0x498] sm:$0xff]
        %v1156 = vld [vmem:[%s3 + $0x4a0] sm:$0xff]
        %v1157 = vld [vmem:[%s3 + $0x4a8] sm:$0xff]
        %v1158 = vld [vmem:[%s3 + $0x4b0] sm:$0xff]
        %v1159 = vld [vmem:[%s3 + $0x4b8] sm:$0xff]
        %v1160 = vld [vmem:[%s3 + $0x4c0] sm:$0xff]
        %v1161 = vld [vmem:[%s3 + $0x4c8] sm:$0xff]
        %v1162 = vld [vmem:[%s3 + $0x4d0] sm:$0xff]
        %v1163 = vld [vmem:[%s3 + $0x4d8] sm:$0xff]
        %v1164 = vld [vmem:[%s3 + $0x4e0] sm:$0xff]
        %v1165 = vld [vmem:[%s3 + $0x4e8] sm:$0xff]
        %v1166 = vld [vmem:[%s3 + $0x4f0] sm:$0xff]
        %v1167 = vld [vmem:[%s3 + $0x4f8] sm:$0xff]
        %1168 = vmatpush.msra.mxu0 %v1158
        %1169 = vmatpush.msra.mxu0 %v1148
        %1170 = vmatpush.msra.mxu0 %v1138
        %1171 = vmatpush.msra.mxu0 %v1128
        %1172 = vmatpush.msra.mxu0 %v1118
        %1173 = vmatpush.msra.mxu0 %v1108
        %1174 = vmatpush.msra.mxu0 %v1098
        %1175 = vmatpush.msra.mxu0 %v1088
        %1176 = vmatpush.msra.mxu0 %v1078
        %1177 = vmatpush.msra.mxu0 %v1068
        %1178 = vmatpush.msra.mxu0 %v1058
        %1179 = vmatpush.msra.mxu0 %v1048
        %1180 = vmatpush.msra.mxu0 %v1038
        %1181 = vmatpush.msra.mxu0 %v1028
        %1182 = vmatpush.msra.mxu0 %v1018
        %1183 = vmatpush.msra.mxu0 %v1008
        %1184 = vmatmul.f32.gmra.mxu0 %v902
        %v1185 = vpop.f32.mrf.mxu0
        %v1186 = vadd.f32 0.0, %v1185
        %1187 = vmatmul.f32.gmra.mxu0 %v1007
        %v1188 = vpop.f32.mrf.mxu0
        %v1189 = vadd.f32 0.0, %v1188
        %1190 = vdwg.mxu0
        %1191 = vmatpush.msra.mxu0 %v1159
        %1192 = vmatpush.msra.mxu0 %v1149
        %1193 = vmatpush.msra.mxu0 %v1139
        %1194 = vmatpush.msra.mxu0 %v1129
        %1195 = vmatpush.msra.mxu0 %v1119
        %1196 = vmatpush.msra.mxu0 %v1109
        %1197 = vmatpush.msra.mxu0 %v1099
        %1198 = vmatpush.msra.mxu0 %v1089
        %1199 = vmatpush.msra.mxu0 %v1079
        %1200 = vmatpush.msra.mxu0 %v1069
        %1201 = vmatpush.msra.mxu0 %v1059
        %1202 = vmatpush.msra.mxu0 %v1049
        %1203 = vmatpush.msra.mxu0 %v1039
        %1204 = vmatpush.msra.mxu0 %v1029
        %1205 = vmatpush.msra.mxu0 %v1019
        %1206 = vmatpush.msra.mxu0 %v1009
        %1207 = vmatmul.f32.gmra.mxu0 %v902
        %v1208 = vpop.f32.mrf.mxu0
        %v1209 = vadd.f32 0.0, %v1208
        %1210 = vmatmul.f32.gmra.mxu0 %v1007
        %v1211 = vpop.f32.mrf.mxu0
        %v1212 = vadd.f32 0.0, %v1211
        %1213 = vdwg.mxu0
        %1214 = vmatpush.msra.mxu0 %v1160
        %1215 = vmatpush.msra.mxu0 %v1150
        %1216 = vmatpush.msra.mxu0 %v1140
        %1217 = vmatpush.msra.mxu0 %v1130
        %1218 = vmatpush.msra.mxu0 %v1120
        %1219 = vmatpush.msra.mxu0 %v1110
        %1220 = vmatpush.msra.mxu0 %v1100
        %1221 = vmatpush.msra.mxu0 %v1090
        %1222 = vmatpush.msra.mxu0 %v1080
        %1223 = vmatpush.msra.mxu0 %v1070
        %1224 = vmatpush.msra.mxu0 %v1060
        %1225 = vmatpush.msra.mxu0 %v1050
        %1226 = vmatpush.msra.mxu0 %v1040
        %1227 = vmatpush.msra.mxu0 %v1030
        %1228 = vmatpush.msra.mxu0 %v1020
        %1229 = vmatpush.msra.mxu0 %v1010
        %1230 = vmatmul.f32.gmra.mxu0 %v902
        %v1231 = vpop.f32.mrf.mxu0
        %v1232 = vadd.f32 0.0, %v1231
        %1233 = vmatmul.f32.gmra.mxu0 %v1007
        %v1234 = vpop.f32.mrf.mxu0
        %v1235 = vadd.f32 0.0, %v1234
        %1236 = vdwg.mxu0
        %1237 = vmatpush.msra.mxu0 %v1161
        %1238 = vmatpush.msra.mxu0 %v1151
        %1239 = vmatpush.msra.mxu0 %v1141
        %1240 = vmatpush.msra.mxu0 %v1131
        %1241 = vmatpush.msra.mxu0 %v1121
        %1242 = vmatpush.msra.mxu0 %v1111
        %1243 = vmatpush.msra.mxu0 %v1101
        %1244 = vmatpush.msra.mxu0 %v1091
        %1245 = vmatpush.msra.mxu0 %v1081
        %1246 = vmatpush.msra.mxu0 %v1071
        %1247 = vmatpush.msra.mxu0 %v1061
        %1248 = vmatpush.msra.mxu0 %v1051
        %1249 = vmatpush.msra.mxu0 %v1041
        %1250 = vmatpush.msra.mxu0 %v1031
        %1251 = vmatpush.msra.mxu0 %v1021
        %1252 = vmatpush.msra.mxu0 %v1011
        %1253 = vmatmul.f32.gmra.mxu0 %v902
        %v1254 = vpop.f32.mrf.mxu0
        %v1255 = vadd.f32 0.0, %v1254
        %1256 = vmatmul.f32.gmra.mxu0 %v1007
        %v1257 = vpop.f32.mrf.mxu0
        %v1258 = vadd.f32 0.0, %v1257
        %1259 = vdwg.mxu0
        %1260 = vmatpush.msra.mxu0 %v1162
        %1261 = vmatpush.msra.mxu0 %v1152
        %1262 = vmatpush.msra.mxu0 %v1142
        %1263 = vmatpush.msra.mxu0 %v1132
        %1264 = vmatpush.msra.mxu0 %v1122
        %1265 = vmatpush.msra.mxu0 %v1112
        %1266 = vmatpush.msra.mxu0 %v1102
        %1267 = vmatpush.msra.mxu0 %v1092
        %1268 = vmatpush.msra.mxu0 %v1082
        %1269 = vmatpush.msra.mxu0 %v1072
        %1270 = vmatpush.msra.mxu0 %v1062
        %1271 = vmatpush.msra.mxu0 %v1052
        %1272 = vmatpush.msra.mxu0 %v1042
        %1273 = vmatpush.msra.mxu0 %v1032
        %1274 = vmatpush.msra.mxu0 %v1022
        %1275 = vmatpush.msra.mxu0 %v1012
        %1276 = vmatmul.f32.gmra.mxu0 %v902
        %v1277 = vpop.f32.mrf.mxu0
        %v1278 = vadd.f32 0.0, %v1277
        %1279 = vmatmul.f32.gmra.mxu0 %v1007
        %v1280 = vpop.f32.mrf.mxu0
        %v1281 = vadd.f32 0.0, %v1280
        %1282 = vdwg.mxu0
        %1283 = vmatpush.msra.mxu0 %v1163
        %1284 = vmatpush.msra.mxu0 %v1153
        %1285 = vmatpush.msra.mxu0 %v1143
        %1286 = vmatpush.msra.mxu0 %v1133
        %1287 = vmatpush.msra.mxu0 %v1123
        %1288 = vmatpush.msra.mxu0 %v1113
        %1289 = vmatpush.msra.mxu0 %v1103
        %1290 = vmatpush.msra.mxu0 %v1093
        %1291 = vmatpush.msra.mxu0 %v1083
        %1292 = vmatpush.msra.mxu0 %v1073
        %1293 = vmatpush.msra.mxu0 %v1063
        %1294 = vmatpush.msra.mxu0 %v1053
        %1295 = vmatpush.msra.mxu0 %v1043
        %1296 = vmatpush.msra.mxu0 %v1033
        %1297 = vmatpush.msra.mxu0 %v1023
        %1298 = vmatpush.msra.mxu0 %v1013
        %1299 = vmatmul.f32.gmra.mxu0 %v902
        %v1300 = vpop.f32.mrf.mxu0
        %v1301 = vadd.f32 0.0, %v1300
        %1302 = vmatmul.f32.gmra.mxu0 %v1007
        %v1303 = vpop.f32.mrf.mxu0
        %v1304 = vadd.f32 0.0, %v1303
        %1305 = vdwg.mxu0
        %1306 = vmatpush.msra.mxu0 %v1164
        %1307 = vmatpush.msra.mxu0 %v1154
        %1308 = vmatpush.msra.mxu0 %v1144
        %1309 = vmatpush.msra.mxu0 %v1134
        %1310 = vmatpush.msra.mxu0 %v1124
        %1311 = vmatpush.msra.mxu0 %v1114
        %1312 = vmatpush.msra.mxu0 %v1104
        %1313 = vmatpush.msra.mxu0 %v1094
        %1314 = vmatpush.msra.mxu0 %v1084
        %1315 = vmatpush.msra.mxu0 %v1074
        %1316 = vmatpush.msra.mxu0 %v1064
        %1317 = vmatpush.msra.mxu0 %v1054
        %1318 = vmatpush.msra.mxu0 %v1044
        %1319 = vmatpush.msra.mxu0 %v1034
        %1320 = vmatpush.msra.mxu0 %v1024
        %1321 = vmatpush.msra.mxu0 %v1014
        %1322 = vmatmul.f32.gmra.mxu0 %v902
        %v1323 = vpop.f32.mrf.mxu0
        %v1324 = vadd.f32 0.0, %v1323
        %1325 = vmatmul.f32.gmra.mxu0 %v1007
        %v1326 = vpop.f32.mrf.mxu0
        %v1327 = vadd.f32 0.0, %v1326
        %1328 = vdwg.mxu0
        %1329 = vmatpush.msra.mxu0 %v1165
        %1330 = vmatpush.msra.mxu0 %v1155
        %1331 = vmatpush.msra.mxu0 %v1145
        %1332 = vmatpush.msra.mxu0 %v1135
        %1333 = vmatpush.msra.mxu0 %v1125
        %1334 = vmatpush.msra.mxu0 %v1115
        %1335 = vmatpush.msra.mxu0 %v1105
        %1336 = vmatpush.msra.mxu0 %v1095
        %1337 = vmatpush.msra.mxu0 %v1085
        %1338 = vmatpush.msra.mxu0 %v1075
        %1339 = vmatpush.msra.mxu0 %v1065
        %1340 = vmatpush.msra.mxu0 %v1055
        %1341 = vmatpush.msra.mxu0 %v1045
        %1342 = vmatpush.msra.mxu0 %v1035
        %1343 = vmatpush.msra.mxu0 %v1025
        %1344 = vmatpush.msra.mxu0 %v1015
        %1345 = vmatmul.f32.gmra.mxu0 %v902
        %v1346 = vpop.f32.mrf.mxu0
        %v1347 = vadd.f32 0.0, %v1346
        %1348 = vmatmul.f32.gmra.mxu0 %v1007
        %v1349 = vpop.f32.mrf.mxu0
        %v1350 = vadd.f32 0.0, %v1349
        %1351 = vdwg.mxu0
        %1352 = vmatpush.msra.mxu0 %v1166
        %1353 = vmatpush.msra.mxu0 %v1156
        %1354 = vmatpush.msra.mxu0 %v1146
        %1355 = vmatpush.msra.mxu0 %v1136
        %1356 = vmatpush.msra.mxu0 %v1126
        %1357 = vmatpush.msra.mxu0 %v1116
        %1358 = vmatpush.msra.mxu0 %v1106
        %1359 = vmatpush.msra.mxu0 %v1096
        %1360 = vmatpush.msra.mxu0 %v1086
        %1361 = vmatpush.msra.mxu0 %v1076
        %1362 = vmatpush.msra.mxu0 %v1066
        %1363 = vmatpush.msra.mxu0 %v1056
        %1364 = vmatpush.msra.mxu0 %v1046
        %1365 = vmatpush.msra.mxu0 %v1036
        %1366 = vmatpush.msra.mxu0 %v1026
        %1367 = vmatpush.msra.mxu0 %v1016
        %1368 = vmatmul.f32.gmra.mxu0 %v902
        %v1369 = vpop.f32.mrf.mxu0
        %v1370 = vadd.f32 0.0, %v1369
        %1371 = vmatmul.f32.gmra.mxu0 %v1007
        %v1372 = vpop.f32.mrf.mxu0
        %v1373 = vadd.f32 0.0, %v1372
        %1374 = vdwg.mxu0
        %1375 = vmatpush.msra.mxu0 %v1167
        %1376 = vmatpush.msra.mxu0 %v1157
        %1377 = vmatpush.msra.mxu0 %v1147
        %1378 = vmatpush.msra.mxu0 %v1137
        %1379 = vmatpush.msra.mxu0 %v1127
        %1380 = vmatpush.msra.mxu0 %v1117
        %1381 = vmatpush.msra.mxu0 %v1107
        %1382 = vmatpush.msra.mxu0 %v1097
        %1383 = vmatpush.msra.mxu0 %v1087
        %1384 = vmatpush.msra.mxu0 %v1077
        %1385 = vmatpush.msra.mxu0 %v1067
        %1386 = vmatpush.msra.mxu0 %v1057
        %1387 = vmatpush.msra.mxu0 %v1047
        %1388 = vmatpush.msra.mxu0 %v1037
        %1389 = vmatpush.msra.mxu0 %v1027
        %1390 = vmatpush.msra.mxu0 %v1017
        %1391 = vmatmul.f32.gmra.mxu0 %v902
        %v1392 = vpop.f32.mrf.mxu0
        %v1393 = vadd.f32 0.0, %v1392
        %1394 = vmatmul.f32.gmra.mxu0 %v1007
        %v1395 = vpop.f32.mrf.mxu0
        %v1396 = vadd.f32 0.0, %v1395
        %1397 = vdwg.mxu0
        %v1398 = vadd.f32 %v1186, %v1235
        %v1399 = vadd.f32 %v1209, %v1258
        %v1402 = vrot.slane %v1278, 1
        %v1403 = vrot.slane %v1301, 1
        %v1406 = vadd.f32 %v1398, %v1402
        %v1407 = vadd.f32 %v1399, %v1403
        %v1410 = vrot.slane %v1327, 1
        %v1411 = vrot.slane %v1350, 1
        %v1414 = vadd.f32 %v1406, %v1410
        %v1415 = vadd.f32 %v1407, %v1411
        %v1418 = vrot.slane %v1370, 2
        %v1419 = vrot.slane %v1393, 2
        %v1422 = vadd.f32 %v1414, %v1418
        %v1423 = vadd.f32 %v1415, %v1419
        %v1426 = vrot.slane %v1232, 1
        %v1427 = vrot.slane %v1255, 1
        %v1430 = vadd.f32 %v1189, %v1426
        %v1431 = vadd.f32 %v1212, %v1427
        %v1434 = vrot.slane %v1281, 1
        %v1435 = vrot.slane %v1304, 1
        %v1438 = vadd.f32 %v1430, %v1434
        %v1439 = vadd.f32 %v1431, %v1435
        %v1442 = vrot.slane %v1324, 2
        %v1443 = vrot.slane %v1347, 2
        %v1446 = vadd.f32 %v1438, %v1442
        %v1447 = vadd.f32 %v1439, %v1443
        %v1450 = vrot.slane %v1373, 2
        %v1451 = vrot.slane %v1396, 2
        %v1454 = vadd.f32 %v1446, %v1450
        %v1455 = vadd.f32 %v1447, %v1451
        %v1456 = vmax.f32 %v1422, %v1423
        %v1457 = vmax.f32 %v1454, %v1455
        %v1458 = vmax.f32 %v1456, %v1457
        %v1459 = vld [vmem:[%s4] sm:$0x1]
        %v1461 = vperm.slane %v1459, 0
        %v1463 = vadd.f32 %v1458, %v1461
        %v1464 = vmax.f32 %v1463, 0.0
        %v1465 = vld [vmem:[%s5] sm:$0xff]
        %v1466 = vld [vmem:[%s5 + $0x8] sm:$0xff]
        %v1467 = vld [vmem:[%s5 + $0x10] sm:$0xff]
        %v1468 = vld [vmem:[%s5 + $0x18] sm:$0xff]
        %v1469 = vld [vmem:[%s5 + $0x20] sm:$0xff]
        %v1470 = vld [vmem:[%s5 + $0x28] sm:$0xff]
        %v1471 = vld [vmem:[%s5 + $0x30] sm:$0xff]
        %v1472 = vld [vmem:[%s5 + $0x38] sm:$0xff]
        %v1473 = vld [vmem:[%s5 + $0x40] sm:$0xff]
        %v1474 = vld [vmem:[%s5 + $0x48] sm:$0xff]
        %v1475 = vld [vmem:[%s5 + $0x50] sm:$0xff]
        %v1476 = vld [vmem:[%s5 + $0x58] sm:$0xff]
        %v1477 = vld [vmem:[%s5 + $0x60] sm:$0xff]
        %v1478 = vld [vmem:[%s5 + $0x68] sm:$0xff]
        %v1479 = vld [vmem:[%s5 + $0x70] sm:$0xff]
        %v1480 = vld [vmem:[%s5 + $0x78] sm:$0xff]
        %s1481 = scalar_lea.vmem %s5, 128
        %v1482 = vld [vmem:[%s1481] sm:$0xff]
        %v1483 = vld [vmem:[%s1481 + $0x8] sm:$0xff]
        %v1484 = vld [vmem:[%s1481 + $0x10] sm:$0xff]
        %v1485 = vld [vmem:[%s1481 + $0x18] sm:$0xff]
        %v1486 = vld [vmem:[%s1481 + $0x20] sm:$0xff]
        %v1487 = vld [vmem:[%s1481 + $0x28] sm:$0xff]
        %v1488 = vld [vmem:[%s1481 + $0x30] sm:$0xff]
        %v1489 = vld [vmem:[%s1481 + $0x38] sm:$0xff]
        %v1490 = vld [vmem:[%s1481 + $0x40] sm:$0xff]
        %v1491 = vld [vmem:[%s1481 + $0x48] sm:$0xff]
        %v1492 = vld [vmem:[%s1481 + $0x50] sm:$0xff]
        %v1493 = vld [vmem:[%s1481 + $0x58] sm:$0xff]
        %v1494 = vld [vmem:[%s1481 + $0x60] sm:$0xff]
        %v1495 = vld [vmem:[%s1481 + $0x68] sm:$0xff]
        %v1496 = vld [vmem:[%s1481 + $0x70] sm:$0xff]
        %v1497 = vld [vmem:[%s1481 + $0x78] sm:$0xff]
        %v1499 = vrot.slane %v1464, 1
        %1501 = vmatpush.msra.mxu0 %v1497
        %1502 = vmatpush.msra.mxu0 %v1496
        %1503 = vmatpush.msra.mxu0 %v1495
        %1504 = vmatpush.msra.mxu0 %v1494
        %1505 = vmatpush.msra.mxu0 %v1493
        %1506 = vmatpush.msra.mxu0 %v1492
        %1507 = vmatpush.msra.mxu0 %v1491
        %1508 = vmatpush.msra.mxu0 %v1490
        %1509 = vmatpush.msra.mxu0 %v1489
        %1510 = vmatpush.msra.mxu0 %v1488
        %1511 = vmatpush.msra.mxu0 %v1487
        %1512 = vmatpush.msra.mxu0 %v1486
        %1513 = vmatpush.msra.mxu0 %v1485
        %1514 = vmatpush.msra.mxu0 %v1484
        %1515 = vmatpush.msra.mxu0 %v1483
        %1516 = vmatpush.msra.mxu0 %v1482
        %1517 = vmatmul.f32.gmra.mxu0 %v1499
        %v1518 = vpop.f32.mrf.mxu0
        %v1519 = vadd.f32 0.0, %v1518
        %1520 = vdwg.mxu0
        %1521 = vmatpush.msra.mxu0 %v1480
        %1522 = vmatpush.msra.mxu0 %v1479
        %1523 = vmatpush.msra.mxu0 %v1478
        %1524 = vmatpush.msra.mxu0 %v1477
        %1525 = vmatpush.msra.mxu0 %v1476
        %1526 = vmatpush.msra.mxu0 %v1475
        %1527 = vmatpush.msra.mxu0 %v1474
        %1528 = vmatpush.msra.mxu0 %v1473
        %1529 = vmatpush.msra.mxu0 %v1472
        %1530 = vmatpush.msra.mxu0 %v1471
        %1531 = vmatpush.msra.mxu0 %v1470
        %1532 = vmatpush.msra.mxu0 %v1469
        %1533 = vmatpush.msra.mxu0 %v1468
        %1534 = vmatpush.msra.mxu0 %v1467
        %1535 = vmatpush.msra.mxu0 %v1466
        %1536 = vmatpush.msra.mxu0 %v1465
        %1537 = vmatmul.f32.gmra.mxu0 %v1464
        %v1538 = vpop.f32.mrf.mxu0
        %v1539 = vadd.f32 %v1519, %v1538
        %1540 = vdwg.mxu0
        %s1541 = scalar_lea.vmem %s5, 256
        %v1542 = vld [vmem:[%s1541] sm:$0xff]
        %v1543 = vld [vmem:[%s1541 + $0x8] sm:$0xff]
        %v1544 = vld [vmem:[%s1541 + $0x10] sm:$0xff]
        %v1545 = vld [vmem:[%s1541 + $0x18] sm:$0xff]
        %v1546 = vld [vmem:[%s1541 + $0x20] sm:$0xff]
        %v1547 = vld [vmem:[%s1541 + $0x28] sm:$0xff]
        %v1548 = vld [vmem:[%s1541 + $0x30] sm:$0xff]
        %v1549 = vld [vmem:[%s1541 + $0x38] sm:$0xff]
        %v1550 = vld [vmem:[%s1541 + $0x40] sm:$0xff]
        %v1551 = vld [vmem:[%s1541 + $0x48] sm:$0xff]
        %v1552 = vld [vmem:[%s1541 + $0x50] sm:$0xff]
        %v1553 = vld [vmem:[%s1541 + $0x58] sm:$0xff]
        %v1554 = vld [vmem:[%s1541 + $0x60] sm:$0xff]
        %v1555 = vld [vmem:[%s1541 + $0x68] sm:$0xff]
        %v1556 = vld [vmem:[%s1541 + $0x70] sm:$0xff]
        %v1557 = vld [vmem:[%s1541 + $0x78] sm:$0xff]
        %v1558 = vrot.slane %v1464, 2
        %1560 = vmatpush.msra.mxu0 %v1557
        %1561 = vmatpush.msra.mxu0 %v1556
        %1562 = vmatpush.msra.mxu0 %v1555
        %1563 = vmatpush.msra.mxu0 %v1554
        %1564 = vmatpush.msra.mxu0 %v1553
        %1565 = vmatpush.msra.mxu0 %v1552
        %1566 = vmatpush.msra.mxu0 %v1551
        %1567 = vmatpush.msra.mxu0 %v1550
        %1568 = vmatpush.msra.mxu0 %v1549
        %1569 = vmatpush.msra.mxu0 %v1548
        %1570 = vmatpush.msra.mxu0 %v1547
        %1571 = vmatpush.msra.mxu0 %v1546
        %1572 = vmatpush.msra.mxu0 %v1545
        %1573 = vmatpush.msra.mxu0 %v1544
        %1574 = vmatpush.msra.mxu0 %v1543
        %1575 = vmatpush.msra.mxu0 %v1542
        %1576 = vmatmul.f32.gmra.mxu0 %v1558
        %v1577 = vpop.f32.mrf.mxu0
        %v1578 = vadd.f32 0.0, %v1577
        %1579 = vdwg.mxu0
        %v1580 = vadd.f32 %v1539, %v1578
        %s1581 = scalar_lea.vmem %s5, 384
        %v1582 = vld [vmem:[%s1581] sm:$0xff]
        %v1583 = vld [vmem:[%s1581 + $0x8] sm:$0xff]
        %v1584 = vld [vmem:[%s1581 + $0x10] sm:$0xff]
        %v1585 = vld [vmem:[%s1581 + $0x18] sm:$0xff]
        %v1586 = vld [vmem:[%s1581 + $0x20] sm:$0xff]
        %v1587 = vld [vmem:[%s1581 + $0x28] sm:$0xff]
        %v1588 = vld [vmem:[%s1581 + $0x30] sm:$0xff]
        %v1589 = vld [vmem:[%s1581 + $0x38] sm:$0xff]
        %v1590 = vld [vmem:[%s1581 + $0x40] sm:$0xff]
        %v1591 = vld [vmem:[%s1581 + $0x48] sm:$0xff]
        %v1592 = vld [vmem:[%s1581 + $0x50] sm:$0xff]
        %v1593 = vld [vmem:[%s1581 + $0x58] sm:$0xff]
        %v1594 = vld [vmem:[%s1581 + $0x60] sm:$0xff]
        %v1595 = vld [vmem:[%s1581 + $0x68] sm:$0xff]
        %v1596 = vld [vmem:[%s1581 + $0x70] sm:$0xff]
        %v1597 = vld [vmem:[%s1581 + $0x78] sm:$0xff]
        %v1598 = vrot.slane %v1464, 3
        %1600 = vmatpush.msra.mxu0 %v1597
        %1601 = vmatpush.msra.mxu0 %v1596
        %1602 = vmatpush.msra.mxu0 %v1595
        %1603 = vmatpush.msra.mxu0 %v1594
        %1604 = vmatpush.msra.mxu0 %v1593
        %1605 = vmatpush.msra.mxu0 %v1592
        %1606 = vmatpush.msra.mxu0 %v1591
        %1607 = vmatpush.msra.mxu0 %v1590
        %1608 = vmatpush.msra.mxu0 %v1589
        %1609 = vmatpush.msra.mxu0 %v1588
        %1610 = vmatpush.msra.mxu0 %v1587
        %1611 = vmatpush.msra.mxu0 %v1586
        %1612 = vmatpush.msra.mxu0 %v1585
        %1613 = vmatpush.msra.mxu0 %v1584
        %1614 = vmatpush.msra.mxu0 %v1583
        %1615 = vmatpush.msra.mxu0 %v1582
        %1616 = vmatmul.f32.gmra.mxu0 %v1598
        %v1617 = vpop.f32.mrf.mxu0
        %v1618 = vadd.f32 0.0, %v1617
        %1619 = vdwg.mxu0
        %v1620 = vadd.f32 %v1580, %v1618
        %v1621 = vld [vmem:[%s6] sm:$0x1]
        %v1622 = vadd.f32 %v1620, %v1621
        %v1623 = vmax.f32 %v1622, 0.0
        %v1624 = vld [vmem:[%s7] sm:$0xff]
        %v1625 = vld [vmem:[%s7 + $0x8] sm:$0xff]
        %v1626 = vld [vmem:[%s7 + $0x10] sm:$0xff]
        %v1627 = vld [vmem:[%s7 + $0x18] sm:$0xff]
        %v1628 = vld [vmem:[%s7 + $0x20] sm:$0xff]
        %v1629 = vld [vmem:[%s7 + $0x28] sm:$0xff]
        %v1630 = vld [vmem:[%s7 + $0x30] sm:$0x3]
        %v1631 = vld [vmem:[%s8] sm:$0x1]
        %vm1632 = vcmask 408576
        %v1634 = vsel %vm1632, %v1623, 0
        %vm1636 = vcmask 1041408
        %v1638 = vsel %vm1636, %v1630, 0
        %1640 = vmatpush.msra.mxu0 0.0
        %1641 = vmatpush.msra.mxu0 0.0
        %1642 = vmatpush.msra.mxu0 0.0
        %1643 = vmatpush.msra.mxu0 0.0
        %1644 = vmatpush.msra.mxu0 0.0
        %1645 = vmatpush.msra.mxu0 0.0
        %1646 = vmatpush.msra.mxu0 0.0
        %1647 = vmatpush.msra.mxu0 0.0
        %1648 = vmatpush.msra.mxu0 0.0
        %1649 = vmatpush.msra.mxu0 %v1638
        %1650 = vmatpush.msra.mxu0 %v1629
        %1651 = vmatpush.msra.mxu0 %v1628
        %1652 = vmatpush.msra.mxu0 %v1627
        %1653 = vmatpush.msra.mxu0 %v1626
        %1654 = vmatpush.msra.mxu0 %v1625
        %1655 = vmatpush.msra.mxu0 %v1624
        %1656 = vmatmul.f32.gmra.mxu0 %v1634
        %v1657 = vpop.f32.mrf.mxu0
        %v1658 = vadd.f32 %v1631, %v1657
        %1659 = vdwg.mxu0
        %vm1660 = vcmask 73728
        %v1661 = vsel %vm1660, %v1658, -inf
        %1662 = vmax.xlane.f32.xlu0 %v1661
        %v1663 = vpop.xlane.xlu0 %1662
        %v1664 = vsub.f32 %v1658, %v1663
        %v1665 = vmul.f32 %v1664, 1.442695
        %v1666 = vpow.pop %v1665
        %v1667 = vsel %vm1660, %v1666, 0.0
        %1668 = vadd.xlane.f32.xlu0 %v1667
        %v1669 = vpop.xlane.xlu0 %1668
        %v1670 = vlog2.pop %v1669
        %v1671 = vmul.f32 %v1670, 0.6931472
        %v1672 = vsub.f32 %v1664, %v1671
        %1673 = vst.msk [vmem:[%s341] sm:$0x1] %vm1660, %v1672
        %s1674 = sand.u32 %s226, 1
        %s1675 = scalar_lea.sflag [#allocation4], %s1674
        %s1676 = sand.u32 %s226, 1
        %s1677 = scalar_lea.vmem [#allocation5], %s1676
        // Predicated region
        $region61: #{net_forward.1} parent=55 // pred_check
          %p1678 = pneg %p236
        $region62: #{net_forward.1} parent=55 // pred_check_branch
          %1680 = sbr.rel (%p1678) target = $region64
        $region63: #{net_forward.1} parent=55 // pred_region
          %1682 = vsyncadd %s1675, 0
          %s1683 = scalar_lea.hbm %s9, %s24
          %s1685 = sshll.u32 %s1677, 4
          %s1686 = int_to_ptr.vmem [resolvable:$true] %s1685
          %s1687 = sshll.u32 %s1683, 4
          %s1688 = int_to_ptr.hbm [resolvable:$true] %s1687
          %1690 = dma.vmem_to_hbm [thread:$0]  %s1686, 16, %s1688, %s1675
        $region64: #{net_forward.1} parent=55 // pred_fallthru
          _
      $region56: #{net_forward.1} parent=5 // pred_fallthru
        _
      %p1691 = scmp.le.s32.totalorder 2, %s19
      // Predicated region
      $region65: #{net_forward.1} parent=5 // pred_check
        %p1692 = pneg %p1691
      $region66: #{net_forward.1} parent=5 // pred_check_branch
        %1694 = sbr.rel (%p1692) target = $region68
      $region67: #{net_forward.1} parent=5 // pred_region
        %s1695 = ssub.s32 %s19, 2
        // Predicated region
        $region69: #{net_forward.1} parent=67 // pred_check
          %p1696 = pneg %p242
        $region70: #{net_forward.1} parent=67 // pred_check_branch
          %1698 = sbr.rel (%p1696) target = $region72
        $region71: #{net_forward.1} parent=67 // pred_region
          %s1699 = sand.u32 %s227, 1
          %s1700 = scalar_lea.sflag [#allocation4], %s1699
          %s1701 = sand.u32 %s227, 1
          %s1702 = scalar_lea.vmem [#allocation5], %s1701
          %1704 = dma.done %s1700, 16
        $region72: #{net_forward.1} parent=67 // pred_fallthru
          _
      $region68: #{net_forward.1} parent=5 // pred_fallthru
        _
    $region6: #{net_forward.1} parent=1 // loop_footer
      %s23 = sadd.s32 1, %s19
    $region7: #{net_forward.1} parent=1 // loop_footer_branch
      %18 = sbr.rel target = $region3
    $region8: #{net_forward.1} parent=1 // loop_exit
      _
    %1705 = vsyncpa [#allocation3], 1
    %s1706 = scalar_lea.sflag [#allocation3], 1
    %1707 = vsyncpa %s1706, 1
    %1708 = vsyncpa [#allocation4], 1
    %s1709 = scalar_lea.sflag [#allocation4], 1
    %1710 = vsyncpa %s1709, 1

</llo_original>
